<compile_context>
chip_gen: v5e
topology: v5e:2x2
jax: 0.10.0
libtpu: 0.0.40
codegen_flags: <defaults>
</compile_context>

<pallas_src>
import jax
import jax.numpy as jnp
from jax.experimental import pallas as pl
from jax.experimental.pallas import tpu as pltpu


# ---------------------------------------------------------------------------
# Kernel
# ---------------------------------------------------------------------------
def _residual_block_kernel(x_ref, w1_ref, b1_ref, w2_ref, b2_ref, o_ref):
    """out = x + (relu(x @ W1 + b1) @ W2 + b2)   (BN folded into W/b, eval mode)."""
    x = x_ref[...]                               # f32 (bt, D) — true residual input
    xb = x.astype(jnp.bfloat16)                  # cheap VPU cast, hidden under DMA

    # Layer 1: Linear(+folded BN1) -> ReLU   (Dropout == identity in eval)
    h = jnp.dot(xb, w1_ref[...], preferred_element_type=jnp.float32) + b1_ref[...]
    h = jnp.maximum(h, 0.0).astype(jnp.bfloat16)  # bf16 for the 2nd MXU pass

    # Layer 2: Linear(+folded BN2)
    y = jnp.dot(h, w2_ref[...], preferred_element_type=jnp.float32) + b2_ref[...]

    # Residual add against the exact f32 x; lane-dense store (last dim == D).
    o_ref[...] = (x + y).astype(o_ref.dtype)


# ---------------------------------------------------------------------------
# Tile / VMEM sizing helpers
# ---------------------------------------------------------------------------
def _choose_batch_tile(B, D, H, out_bytes, max_tile=4096,
                       vmem_budget=40 * 1024 * 1024):
    """Largest batch tile that fits VMEM, preferring an even grid of >= 4 steps."""
    assert B % 8 == 0, "batch must be a multiple of 8 (TODO(synk): pad ragged batch)"

    def tile_bytes(bt):
        # x (f32, 2-buf) + out (2-buf) + f32 intermediates h and y
        return (2 * bt * D * 4 + 2 * bt * D * out_bytes
                + bt * H * 4 + bt * D * 4)

    candidates = [bt for bt in range(8, min(B, max_tile) + 1, 8)
                  if B % bt == 0 and tile_bytes(bt) <= vmem_budget]
    if not candidates:
        candidates = [8]

    def rank(bt):
        steps = B // bt
        # prefer: (>=4 even steps) > (even steps) > largest tile
        return (steps >= 4 and steps % 2 == 0, steps % 2 == 0, bt)

    return max(candidates, key=rank)


def _vmem_limit_bytes(bt, D, H, out_bytes, weight_buffers):
    """Derive the scoped-VMEM limit from tile sizes; clamp to chip capacity."""
    need = (2 * bt * D * 4                                    # x, f32, double-buffered
            + 2 * bt * D * out_bytes                          # out, double-buffered
            + weight_buffers * (D * H * 2 + H * D * 2 + H * 4 + D * 4)
            + bt * H * 4 + bt * D * 4)                        # f32 intermediates
    limit = max(2 * need, 32 * 1024 * 1024)
    try:
        cap = int(getattr(pltpu.get_tpu_info(), "vmem_capacity_bytes",
                          64 * 1024 * 1024))
    except Exception:
        cap = 64 * 1024 * 1024                                # conservative (v7x/TC)
    return int(min(limit, cap * 3 // 4))


# ---------------------------------------------------------------------------
# Wrapper
# ---------------------------------------------------------------------------
def residual_block_forward(x, params, *, batch_tile=None, out_dtype=None):
    """x: (B, D) float32.  params: folded dict w1 bf16 (D,H), b1 f32 (1,H),
    w2 bf16 (H,D), b2 f32 (1,D).  out_dtype: None -> x.dtype; pass jnp.bfloat16
    when the downstream consumer accepts it (cuts output HBM traffic ~2x)."""
    B, D = x.shape
    H = params["w1"].shape[1]
    assert params["w2"].shape == (H, D)
    out_dtype = x.dtype if out_dtype is None else out_dtype
    out_bytes = jnp.dtype(out_dtype).itemsize

    if batch_tile is None:
        batch_tile = _choose_batch_tile(B, D, H, out_bytes)
    assert B % batch_tile == 0, "batch must be divisible by batch_tile"
    assert batch_tile % 8 == 0, "batch_tile must be a multiple of 8 sublanes"

    w1, b1, w2, b2 = params["w1"], params["b1"], params["w2"], params["b2"]
    # Weights are pre-cast to bf16 once at fold time -> no per-call convert ops.
    assert w1.dtype == jnp.bfloat16 and w2.dtype == jnp.bfloat16

    flops = 4 * B * D * H                                     # two GEMMs, 2 flops/MAC
    bytes_accessed = (B * D * 4 + B * D * out_bytes           # x (f32) + out
                      + w1.size * 2 + w2.size * 2             # weights (bf16)
                      + b1.size * 4 + b2.size * 4)            # biases (f32)
    cost = pl.CostEstimate(flops=flops, transcendentals=0,
                           bytes_accessed=bytes_accessed)
    vmem_limit = _vmem_limit_bytes(batch_tile, D, H, out_bytes, weight_buffers=1)

    def build(weight_buffers):
        # Constant index_map -> weights never re-DMA'd; single-buffer them to
        # free VMEM (weight_buffers=1). Fallback path uses the default (2).
        wkw = ({"pipeline_mode": pl.Buffered(weight_buffers)}
               if weight_buffers != 2 else {})
        return pl.pallas_call(
            _residual_block_kernel,
            out_shape=jax.ShapeDtypeStruct((B, D), out_dtype),
            grid_spec=pltpu.PrefetchScalarGridSpec(
                num_scalar_prefetch=0,
                grid=(B // batch_tile,),
                in_specs=[
                    pl.BlockSpec((batch_tile, D), lambda i: (i, 0)),  # x over batch
                    pl.BlockSpec((D, H), lambda i: (0, 0), **wkw),    # resident W1
                    pl.BlockSpec((1, H), lambda i: (0, 0), **wkw),
                    pl.BlockSpec((H, D), lambda i: (0, 0), **wkw),    # resident W2
                    pl.BlockSpec((1, D), lambda i: (0, 0), **wkw),
                ],
                out_specs=pl.BlockSpec((batch_tile, D), lambda i: (i, 0)),
            ),
            compiler_params=pltpu.CompilerParams(
                dimension_semantics=("parallel",),   # batch axis -> megacore on v7x
                vmem_limit_bytes=vmem_limit,
            ),
            cost_estimate=cost,
        )

    try:
        return build(weight_buffers=1)(x, w1, b1, w2, b2)
    except Exception:
        # Fallback if this jax build rejects Buffered(1): default double-buffering.
        return build(weight_buffers=2)(x, w1, b1, w2, b2)


# ---------------------------------------------------------------------------
# Parameter init (nn.Linear + nn.BatchNorm1d running stats) and BN folding
# ---------------------------------------------------------------------------
def init_params(key, input_dim, hidden_dim):
    ks = jax.random.split(key, 12)

    def linear(kw, kb, fan_in, fan_out):
        bound = fan_in ** -0.5
        w = jax.random.uniform(kw, (fan_in, fan_out), jnp.float32, -bound, bound)
        b = jax.random.uniform(kb, (fan_out,), jnp.float32, -bound, bound)
        return w, b

    def bnorm(kg, kb, km, kv, dim):
        return dict(
            gamma=jax.random.uniform(kg, (dim,), jnp.float32, 0.5, 1.5),
            beta=0.1 * jax.random.normal(kb, (dim,), jnp.float32),
            mean=0.1 * jax.random.normal(km, (dim,), jnp.float32),
            var=jax.random.uniform(kv, (dim,), jnp.float32, 0.5, 1.5),
        )

    w1, b1 = linear(ks[0], ks[1], input_dim, hidden_dim)
    w2, b2 = linear(ks[2], ks[3], hidden_dim, input_dim)
    bn1 = bnorm(ks[4], ks[5], ks[6], ks[7], hidden_dim)
    bn2 = bnorm(ks[8], ks[9], ks[10], ks[11], input_dim)
    return {"w1": w1, "b1": b1, "bn1": bn1, "w2": w2, "b2": b2, "bn2": bn2}


def fold_params(raw, eps=1e-5):
    """Fold eval-mode BatchNorm1d into the preceding Linear (exact), and cast the
    weight matrices to bf16 ONCE so forward calls emit no convert ops."""
    def fold(w, b, bn):
        s = bn["gamma"] / jnp.sqrt(bn["var"] + eps)
        w_f = (w * s[None, :]).astype(jnp.bfloat16)
        b_f = ((b - bn["mean"]) * s + bn["beta"]).astype(jnp.float32)
        return w_f, b_f

    w1, b1 = fold(raw["w1"], raw["b1"], raw["bn1"])
    w2, b2 = fold(raw["w2"], raw["b2"], raw["bn2"])
    return {"w1": w1, "b1": b1.reshape(1, -1), "w2": w2, "b2": b2.reshape(1, -1)}


# ---------------------------------------------------------------------------
# References
# ---------------------------------------------------------------------------
def residual_block_reference(x, folded):
    """Mirrors the kernel's numerics: bf16 MXU inputs, f32 accumulation,
    f32 residual against the original x."""
    xb = x.astype(jnp.bfloat16)
    h = jnp.maximum(
        jnp.dot(xb, folded["w1"], preferred_element_type=jnp.float32) + folded["b1"],
        0.0)
    y = jnp.dot(h.astype(jnp.bfloat16), folded["w2"],
                preferred_element_type=jnp.float32) + folded["b2"]
    return x + y


def residual_block_reference_f32(x, raw, eps=1e-5):
    """Full f32 eval-mode PyTorch math (unfolded), loose sanity check."""
    def bn(z, p):
        return (z - p["mean"]) / jnp.sqrt(p["var"] + eps) * p["gamma"] + p["beta"]
    h = jnp.maximum(bn(x @ raw["w1"] + raw["b1"], raw["bn1"]), 0.0)
    y = bn(h @ raw["w2"] + raw["b2"], raw["bn2"])
    return x + y


# ---------------------------------------------------------------------------
if __name__ == "__main__":
    key = jax.random.PRNGKey(0)
    # MXU/lane-aligned small example: D multiple of 128, H multiple of 256.
    # B=256 -> chooser picks batch_tile=64 (even grid of 4 steps).
    batch, input_dim, hidden_dim = 256, 128, 256
    dropout_rate = 0.1  # identity at inference

    kx, kp = jax.random.split(key)
    x = jax.random.normal(kx, (batch, input_dim), jnp.float32)

    raw = init_params(kp, input_dim, hidden_dim)
    params = fold_params(raw)

    # Default f32 output (matches PyTorch eval output precision).
    out = residual_block_forward(x, params)
    out = jax.block_until_ready(out)
    assert out.shape == (batch, input_dim) and out.dtype == jnp.float32

    # Tight check vs. a reference mirroring the kernel's bf16/f32 numerics.
    ref = residual_block_reference(x, params)
    assert jnp.allclose(out, ref, atol=2e-3, rtol=2e-3), float(
        jnp.max(jnp.abs(out - ref)))

    # Loose sanity check vs. full-f32 eval-mode PyTorch math (bf16 GEMM rounding).
    ref_f32 = residual_block_reference_f32(x, raw)
    assert float(jnp.max(jnp.abs(out - ref_f32))) < 0.5

    # Optional bf16-output path (recommended when the consumer accepts bf16).
    out_bf16 = jax.block_until_ready(
        residual_block_forward(x, params, out_dtype=jnp.bfloat16))
    assert out_bf16.dtype == jnp.bfloat16
    assert jnp.allclose(out_bf16.astype(jnp.float32), ref, atol=6e-2, rtol=3e-2)

    print("KERNEL_OK")
</pallas_src>

<mosaic_0001>
module attributes {stable_mosaic.version = 11 : i64} {
  func.func @_residual_block_kernel(%arg0: i32, %arg1: memref<64x128xf32, #tpu.memory_space<vmem>>, %arg2: memref<128x256xbf16, #tpu.memory_space<vmem>>, %arg3: memref<1x256xf32, #tpu.memory_space<vmem>>, %arg4: memref<256x128xbf16, #tpu.memory_space<vmem>>, %arg5: memref<1x128xf32, #tpu.memory_space<vmem>>, %arg6: memref<64x128xf32, #tpu.memory_space<vmem>>) attributes {dimension_semantics = [#tpu.dimension_semantics<parallel>], iteration_bounds = array<i64: 4>, scalar_prefetch = 0 : i64, scratch_operands = 0 : i64, tpu.core_type = #tpu.core_type<tc>, window_params = [{transform_indices = @transform_0, window_bounds = array<i64: 64, 128>}, {pipeline_mode = #tpu.pipeline_mode<synchronous>, transform_indices = @transform_1, window_bounds = array<i64: 128, 256>}, {pipeline_mode = #tpu.pipeline_mode<synchronous>, transform_indices = @transform_2, window_bounds = array<i64: 1, 256>}, {pipeline_mode = #tpu.pipeline_mode<synchronous>, transform_indices = @transform_3, window_bounds = array<i64: 256, 128>}, {pipeline_mode = #tpu.pipeline_mode<synchronous>, transform_indices = @transform_4, window_bounds = array<i64: 1, 128>}, {transform_indices = @transform_5, window_bounds = array<i64: 64, 128>}]} {
    %c0 = arith.constant 0 : index
    %c0_0 = arith.constant 0 : index
    %0 = vector.load %arg1[%c0, %c0_0] : memref<64x128xf32, #tpu.memory_space<vmem>>, vector<64x128xf32>
    %1 = arith.truncf %0 : vector<64x128xf32> to vector<64x128xbf16>
    %c0_1 = arith.constant 0 : index
    %c0_2 = arith.constant 0 : index
    %2 = vector.load %arg2[%c0_1, %c0_2] : memref<128x256xbf16, #tpu.memory_space<vmem>>, vector<128x256xbf16>
    %cst = arith.constant dense<0.000000e+00> : vector<64x256xf32>
    %3 = tpu.matmul %1, %2, %cst {dimension_numbers = #tpu.dot_dimension_numbers<[1], [0], [0], [1], [0, 0, 1, 1], [], []>} : vector<64x128xbf16>, vector<128x256xbf16>, vector<64x256xf32> -> vector<64x256xf32>
    %c0_3 = arith.constant 0 : index
    %c0_4 = arith.constant 0 : index
    %4 = vector.load %arg3[%c0_3, %c0_4] : memref<1x256xf32, #tpu.memory_space<vmem>>, vector<1x256xf32>
    %5 = vector.broadcast %4 : vector<1x256xf32> to vector<64x256xf32>
    %6 = arith.addf %3, %5 : vector<64x256xf32>
    %cst_5 = arith.constant 0.000000e+00 : f32
    %7 = vector.broadcast %cst_5 : f32 to vector<64x256xf32>
    %8 = arith.maximumf %6, %7 : vector<64x256xf32>
    %9 = arith.truncf %8 : vector<64x256xf32> to vector<64x256xbf16>
    %c0_6 = arith.constant 0 : index
    %c0_7 = arith.constant 0 : index
    %10 = vector.load %arg4[%c0_6, %c0_7] : memref<256x128xbf16, #tpu.memory_space<vmem>>, vector<256x128xbf16>
    %cst_8 = arith.constant dense<0.000000e+00> : vector<64x128xf32>
    %11 = tpu.matmul %9, %10, %cst_8 {dimension_numbers = #tpu.dot_dimension_numbers<[1], [0], [0], [1], [0, 0, 1, 1], [], []>} : vector<64x256xbf16>, vector<256x128xbf16>, vector<64x128xf32> -> vector<64x128xf32>
    %c0_9 = arith.constant 0 : index
    %c0_10 = arith.constant 0 : index
    %12 = vector.load %arg5[%c0_9, %c0_10] : memref<1x128xf32, #tpu.memory_space<vmem>>, vector<1x128xf32>
    %13 = vector.broadcast %12 : vector<1x128xf32> to vector<64x128xf32>
    %14 = arith.addf %11, %13 : vector<64x128xf32>
    %15 = arith.addf %0, %14 : vector<64x128xf32>
    %c0_11 = arith.constant 0 : index
    %c0_12 = arith.constant 0 : index
    %16 = vector.load %arg6[%c0_11, %c0_12] : memref<64x128xf32, #tpu.memory_space<vmem>>, vector<64x128xf32>
    tpu.vector_store %arg6[%c0_11, %c0_12], %15 {strides = array<i32>} : memref<64x128xf32, #tpu.memory_space<vmem>>, vector<64x128xf32>,
    return
  }
  func.func @transform_0(%arg0: i32) -> (i32, i32) {
    %c0_i32 = arith.constant 0 : i32
    %c0_i32_0 = arith.constant 0 : i32
    return %arg0, %c0_i32 : i32, i32
  }
  func.func @transform_1(%arg0: i32) -> (i32, i32) {
    %c0_i32 = arith.constant 0 : i32
    %c0_i32_0 = arith.constant 0 : i32
    %c0_i32_1 = arith.constant 0 : i32
    return %c0_i32, %c0_i32_0 : i32, i32
  }
  func.func @transform_2(%arg0: i32) -> (i32, i32) {
    %c0_i32 = arith.constant 0 : i32
    %c0_i32_0 = arith.constant 0 : i32
    %c0_i32_1 = arith.constant 0 : i32
    return %c0_i32, %c0_i32_0 : i32, i32
  }
  func.func @transform_3(%arg0: i32) -> (i32, i32) {
    %c0_i32 = arith.constant 0 : i32
    %c0_i32_0 = arith.constant 0 : i32
    %c0_i32_1 = arith.constant 0 : i32
    return %c0_i32, %c0_i32_0 : i32, i32
  }
  func.func @transform_4(%arg0: i32) -> (i32, i32) {
    %c0_i32 = arith.constant 0 : i32
    %c0_i32_0 = arith.constant 0 : i32
    %c0_i32_1 = arith.constant 0 : i32
    return %c0_i32, %c0_i32_0 : i32, i32
  }
  func.func @transform_5(%arg0: i32) -> (i32, i32) {
    %c0_i32 = arith.constant 0 : i32
    %c0_i32_0 = arith.constant 0 : i32
    return %arg0, %c0_i32 : i32, i32
  }
}

module attributes {stable_mosaic.version = 11 : i64} {
  func.func @_residual_block_kernel(%arg0: i32, %arg1: memref<64x128xf32, #tpu.memory_space<vmem>>, %arg2: memref<128x256xbf16, #tpu.memory_space<vmem>>, %arg3: memref<1x256xf32, #tpu.memory_space<vmem>>, %arg4: memref<256x128xbf16, #tpu.memory_space<vmem>>, %arg5: memref<1x128xf32, #tpu.memory_space<vmem>>, %arg6: memref<64x128xf32, #tpu.memory_space<vmem>>) attributes {dimension_semantics = [#tpu.dimension_semantics<parallel>], iteration_bounds = array<i64: 4>, scalar_prefetch = 0 : i64, scratch_operands = 0 : i64, tpu.core_type = #tpu.core_type<tc>, window_params = [{transform_indices = @transform_0, window_bounds = array<i64: 64, 128>}, {pipeline_mode = #tpu.pipeline_mode<synchronous>, transform_indices = @transform_1, window_bounds = array<i64: 128, 256>}, {pipeline_mode = #tpu.pipeline_mode<synchronous>, transform_indices = @transform_2, window_bounds = array<i64: 1, 256>}, {pipeline_mode = #tpu.pipeline_mode<synchronous>, transform_indices = @transform_3, window_bounds = array<i64: 256, 128>}, {pipeline_mode = #tpu.pipeline_mode<synchronous>, transform_indices = @transform_4, window_bounds = array<i64: 1, 128>}, {transform_indices = @transform_5, window_bounds = array<i64: 64, 128>}]} {
    %c0 = arith.constant 0 : index
    %c0_0 = arith.constant 0 : index
    %0 = vector.load %arg1[%c0, %c0_0] : memref<64x128xf32, #tpu.memory_space<vmem>>, vector<64x128xf32>
    %1 = arith.truncf %0 : vector<64x128xf32> to vector<64x128xbf16>
    %c0_1 = arith.constant 0 : index
    %c0_2 = arith.constant 0 : index
    %2 = vector.load %arg2[%c0_1, %c0_2] : memref<128x256xbf16, #tpu.memory_space<vmem>>, vector<128x256xbf16>
    %cst = arith.constant dense<0.000000e+00> : vector<64x256xf32>
    %3 = tpu.matmul %1, %2, %cst {dimension_numbers = #tpu.dot_dimension_numbers<[1], [0], [0], [1], [0, 0, 1, 1], [], []>} : vector<64x128xbf16>, vector<128x256xbf16>, vector<64x256xf32> -> vector<64x256xf32>
    %c0_3 = arith.constant 0 : index
    %c0_4 = arith.constant 0 : index
    %4 = vector.load %arg3[%c0_3, %c0_4] : memref<1x256xf32, #tpu.memory_space<vmem>>, vector<1x256xf32>
    %5 = vector.broadcast %4 : vector<1x256xf32> to vector<64x256xf32>
    %6 = arith.addf %3, %5 : vector<64x256xf32>
    %cst_5 = arith.constant 0.000000e+00 : f32
    %7 = vector.broadcast %cst_5 : f32 to vector<64x256xf32>
    %8 = arith.maximumf %6, %7 : vector<64x256xf32>
    %9 = arith.truncf %8 : vector<64x256xf32> to vector<64x256xbf16>
    %c0_6 = arith.constant 0 : index
    %c0_7 = arith.constant 0 : index
    %10 = vector.load %arg4[%c0_6, %c0_7] : memref<256x128xbf16, #tpu.memory_space<vmem>>, vector<256x128xbf16>
    %cst_8 = arith.constant dense<0.000000e+00> : vector<64x128xf32>
    %11 = tpu.matmul %9, %10, %cst_8 {dimension_numbers = #tpu.dot_dimension_numbers<[1], [0], [0], [1], [0, 0, 1, 1], [], []>} : vector<64x256xbf16>, vector<256x128xbf16>, vector<64x128xf32> -> vector<64x128xf32>
    %c0_9 = arith.constant 0 : index
    %c0_10 = arith.constant 0 : index
    %12 = vector.load %arg5[%c0_9, %c0_10] : memref<1x128xf32, #tpu.memory_space<vmem>>, vector<1x128xf32>
    %13 = vector.broadcast %12 : vector<1x128xf32> to vector<64x128xf32>
    %14 = arith.addf %11, %13 : vector<64x128xf32>
    %15 = arith.addf %0, %14 : vector<64x128xf32>
    %c0_11 = arith.constant 0 : index
    %c0_12 = arith.constant 0 : index
    %16 = vector.load %arg6[%c0_11, %c0_12] : memref<64x128xf32, #tpu.memory_space<vmem>>, vector<64x128xf32>
    tpu.vector_store %arg6[%c0_11, %c0_12], %15 {strides = array<i32>} : memref<64x128xf32, #tpu.memory_space<vmem>>, vector<64x128xf32>,
    return
  }
  func.func @transform_0(%arg0: i32) -> (i32, i32) {
    %c0_i32 = arith.constant 0 : i32
    %c0_i32_0 = arith.constant 0 : i32
    return %arg0, %c0_i32 : i32, i32
  }
  func.func @transform_1(%arg0: i32) -> (i32, i32) {
    %c0_i32 = arith.constant 0 : i32
    %c0_i32_0 = arith.constant 0 : i32
    %c0_i32_1 = arith.constant 0 : i32
    return %c0_i32, %c0_i32_0 : i32, i32
  }
  func.func @transform_2(%arg0: i32) -> (i32, i32) {
    %c0_i32 = arith.constant 0 : i32
    %c0_i32_0 = arith.constant 0 : i32
    %c0_i32_1 = arith.constant 0 : i32
    return %c0_i32, %c0_i32_0 : i32, i32
  }
  func.func @transform_3(%arg0: i32) -> (i32, i32) {
    %c0_i32 = arith.constant 0 : i32
    %c0_i32_0 = arith.constant 0 : i32
    %c0_i32_1 = arith.constant 0 : i32
    return %c0_i32, %c0_i32_0 : i32, i32
  }
  func.func @transform_4(%arg0: i32) -> (i32, i32) {
    %c0_i32 = arith.constant 0 : i32
    %c0_i32_0 = arith.constant 0 : i32
    %c0_i32_1 = arith.constant 0 : i32
    return %c0_i32, %c0_i32_0 : i32, i32
  }
  func.func @transform_5(%arg0: i32) -> (i32, i32) {
    %c0_i32 = arith.constant 0 : i32
    %c0_i32_0 = arith.constant 0 : i32
    return %arg0, %c0_i32 : i32, i32
  }
}

</mosaic_0001>

<llo_original>
// kernel: tpu_custom_call.1
$region0: #{tpu_custom_call.1}
  #allocation0 [shape = 'u32[]', space=smem, size = 0x4, offset = 0x4, fixed_abs, tag = 'smem constant byte address 0x4 - core index']
  #allocation1 [shape = 'u32[72,128]{1,0:T(1,128)}', space=vmem, size = 0x9000, scoped, tag = 'internal scratch']
  %s0 = inlined_call_operand.hbm [shape: f32[256,128], index: 0, kind: input, shape index: {}]
  %s1 = inlined_call_operand.hbm [shape: bf16[128,256], index: 1, kind: input, shape index: {}]
  %s2 = inlined_call_operand.hbm [shape: f32[1,256], index: 2, kind: input, shape index: {}]
  %s3 = inlined_call_operand.hbm [shape: bf16[256,128], index: 3, kind: input, shape index: {}]
  %s4 = inlined_call_operand.vmem [shape: f32[1,128], index: 4, kind: input, shape index: {}]
  %s5 = inlined_call_operand.hbm [shape: f32[256,128], index: 5, kind: output, shape index: {}]
  %s6 = sld [smem:[#allocation0]]
  $region69: #{tpu_custom_call.1} parent=0
    _
  %s8 = ssub.s32 1, %s6
  %s9 = scalar_select 0, %s8, %s6
  $region1: #{tpu_custom_call.1} parent=0
    #allocation2 [shape = 'u8[65536]{0}', space=vmem, size = 0x10000, scoped, tag = 'input window, operand 0']
    #allocation3 [shape = 's32[2]{0}', space=sflag, size = 0x8, scoped, tag = 'scoped memory for tpu_custom_call.1']
    #allocation4 [shape = 's32[2]{0}', space=sflag, size = 0x8, scoped, tag = 'scoped memory for tpu_custom_call.1']
    #allocation5 [shape = 'u8[65536]{0}', space=vmem, size = 0x10000, scoped, tag = 'input window, operand 1, single buffered']
    #allocation6 [shape = 's32[1]{0}', space=sflag, size = 0x4, scoped, tag = 'scoped memory for tpu_custom_call.1']
    #allocation7 [shape = 'u8[1024]{0}', space=vmem, size = 0x400, scoped, tag = 'input window, operand 2, single buffered']
    #allocation8 [shape = 'u8[65536]{0}', space=vmem, size = 0x10000, scoped, tag = 'input window, operand 3, single buffered']
    #allocation9 [shape = 's32[1]{0}', space=sflag, size = 0x4, scoped, tag = 'scoped memory for tpu_custom_call.1']
    #allocation10 [shape = 'u8[65536]{0}', space=vmem, size = 0x10000, scoped, tag = 'output window, operand 0']
    %10 = vsyncpa [#allocation3], 0
    %s11 = scalar_lea.sflag [#allocation3], 1
    %12 = vsyncpa %s11, 0
    %13 = vsyncpa [#allocation6], 0
    %14 = vsyncpa [#allocation9], 0
    %15 = vsyncpa [#allocation4], 0
    %s16 = scalar_lea.sflag [#allocation4], 1
    %17 = vsyncpa %s16, 0
    loop: start=0, step=1, limit=6
    $region2: #{tpu_custom_call.1} parent=1 // loop_pre_header
      _
    $region3: #{tpu_custom_call.1} parent=1 // loop_header
      %s19 = sphi 0, %s23
      %p20 = scmp.ge.s32.totalorder %s19, 6
      %s29 = sphi 0, %s31
      %s32 = sphi 0, %s29
      %s33 = sphi 0, %s32
      %s49 = sphi 0, %s33
      %s53 = sphi 0, %s53
      %s55 = sphi 0, %s53
      %s56 = sphi 0, %s55
      %s70 = sphi 0, %s56
      %s74 = sphi 0, %s74
      %s76 = sphi 0, %s74
      %s77 = sphi 0, %s76
      %s91 = sphi 0, %s77
      %s95 = sphi 0, %s95
      %s97 = sphi 0, %s95
      %s98 = sphi 0, %s97
      %s112 = sphi 0, %s98
      %s116 = sphi 0, %s116
      %s118 = sphi 0, %s116
      %s119 = sphi 0, %s118
      %s133 = sphi 0, %s119
      %s139 = sphi 0, %s141
      %s142 = sphi 0, %s139
      %s143 = sphi 0, %s142
      %s159 = sphi 0, %s143
    $region4: #{tpu_custom_call.1} parent=1 // loop_header_branch
      %22 = sbr.rel (%p20) target = $region8
    $region5: #{tpu_custom_call.1} parent=1 // loop_body
      %s24 = ssub.s32 %s19, 1
      %s25 = ssub.s32 %s19, 2
      %s26 = sadd.s32 %s19, 1
      %s27 = ssub.s32 %s19, %s26
      %p28 = scmp.eq.s32.totalorder %s27, 0
      %s30 = sadd.s32 %s29, 1
      %s31 = scalar_select %p28, %s29, %s30
      %p34 = pneg %p28
      %p35 = scmp.eq.s32.totalorder %s19, 3
      %p36 = por %p34, %p35
      %p37 = scmp.ne.s32.totalorder %s29, %s32
      %p38 = scmp.eq.s32.totalorder %s19, 0
      %p39 = por %p37, %p38
      %p40 = scmp.ne.s32.totalorder %s29, %s32
      %p41 = scmp.eq.s32.totalorder %s24, 3
      %p42 = por %p40, %p41
      %p43 = scmp.ne.s32.totalorder %s32, %s33
      %p44 = scmp.eq.s32.totalorder %s24, 0
      %p45 = por %p43, %p44
      %p46 = scmp.ne.s32.totalorder %s32, %s33
      %p47 = scmp.eq.s32.totalorder %s25, 3
      %p48 = por %p46, %p47
      %p50 = scmp.ne.s32.totalorder %s33, %s49
      %p51 = scmp.eq.s32.totalorder %s25, 0
      %p52 = por %p50, %p51
      %s54 = sadd.s32 %s53, 1
      %p57 = scmp.eq.s32.totalorder %s19, 3
      %p58 = scmp.ne.s32.totalorder %s53, %s55
      %p59 = scmp.eq.s32.totalorder %s19, 0
      %p60 = por %p58, %p59
      %p61 = scmp.ne.s32.totalorder %s53, %s55
      %p62 = scmp.eq.s32.totalorder %s24, 3
      %p63 = por %p61, %p62
      %p64 = scmp.ne.s32.totalorder %s55, %s56
      %p65 = scmp.eq.s32.totalorder %s24, 0
      %p66 = por %p64, %p65
      %p67 = scmp.ne.s32.totalorder %s55, %s56
      %p68 = scmp.eq.s32.totalorder %s25, 3
      %p69 = por %p67, %p68
      %p71 = scmp.ne.s32.totalorder %s56, %s70
      %p72 = scmp.eq.s32.totalorder %s25, 0
      %p73 = por %p71, %p72
      %s75 = sadd.s32 %s74, 1
      %p78 = scmp.eq.s32.totalorder %s19, 3
      %p79 = scmp.ne.s32.totalorder %s74, %s76
      %p80 = scmp.eq.s32.totalorder %s19, 0
      %p81 = por %p79, %p80
      %p82 = scmp.ne.s32.totalorder %s74, %s76
      %p83 = scmp.eq.s32.totalorder %s24, 3
      %p84 = por %p82, %p83
      %p85 = scmp.ne.s32.totalorder %s76, %s77
      %p86 = scmp.eq.s32.totalorder %s24, 0
      %p87 = por %p85, %p86
      %p88 = scmp.ne.s32.totalorder %s76, %s77
      %p89 = scmp.eq.s32.totalorder %s25, 3
      %p90 = por %p88, %p89
      %p92 = scmp.ne.s32.totalorder %s77, %s91
      %p93 = scmp.eq.s32.totalorder %s25, 0
      %p94 = por %p92, %p93
      %s96 = sadd.s32 %s95, 1
      %p99 = scmp.eq.s32.totalorder %s19, 3
      %p100 = scmp.ne.s32.totalorder %s95, %s97
      %p101 = scmp.eq.s32.totalorder %s19, 0
      %p102 = por %p100, %p101
      %p103 = scmp.ne.s32.totalorder %s95, %s97
      %p104 = scmp.eq.s32.totalorder %s24, 3
      %p105 = por %p103, %p104
      %p106 = scmp.ne.s32.totalorder %s97, %s98
      %p107 = scmp.eq.s32.totalorder %s24, 0
      %p108 = por %p106, %p107
      %p109 = scmp.ne.s32.totalorder %s97, %s98
      %p110 = scmp.eq.s32.totalorder %s25, 3
      %p111 = por %p109, %p110
      %p113 = scmp.ne.s32.totalorder %s98, %s112
      %p114 = scmp.eq.s32.totalorder %s25, 0
      %p115 = por %p113, %p114
      %s117 = sadd.s32 %s116, 1
      %p120 = scmp.eq.s32.totalorder %s19, 3
      %p121 = scmp.ne.s32.totalorder %s116, %s118
      %p122 = scmp.eq.s32.totalorder %s19, 0
      %p123 = por %p121, %p122
      %p124 = scmp.ne.s32.totalorder %s116, %s118
      %p125 = scmp.eq.s32.totalorder %s24, 3
      %p126 = por %p124, %p125
      %p127 = scmp.ne.s32.totalorder %s118, %s119
      %p128 = scmp.eq.s32.totalorder %s24, 0
      %p129 = por %p127, %p128
      %p130 = scmp.ne.s32.totalorder %s118, %s119
      %p131 = scmp.eq.s32.totalorder %s25, 3
      %p132 = por %p130, %p131
      %p134 = scmp.ne.s32.totalorder %s119, %s133
      %p135 = scmp.eq.s32.totalorder %s25, 0
      %p136 = por %p134, %p135
      %s137 = ssub.s32 %s19, %s26
      %p138 = scmp.eq.s32.totalorder %s137, 0
      %s140 = sadd.s32 %s139, 1
      %s141 = scalar_select %p138, %s139, %s140
      %p144 = pneg %p138
      %p145 = scmp.eq.s32.totalorder %s19, 3
      %p146 = por %p144, %p145
      %p147 = scmp.ne.s32.totalorder %s139, %s142
      %p148 = scmp.eq.s32.totalorder %s19, 0
      %p149 = por %p147, %p148
      %p150 = scmp.ne.s32.totalorder %s139, %s142
      %p151 = scmp.eq.s32.totalorder %s24, 3
      %p152 = por %p150, %p151
      %p153 = scmp.ne.s32.totalorder %s142, %s143
      %p154 = scmp.eq.s32.totalorder %s24, 0
      %p155 = por %p153, %p154
      %p156 = scmp.ne.s32.totalorder %s142, %s143
      %p157 = scmp.eq.s32.totalorder %s25, 3
      %p158 = por %p156, %p157
      %p160 = scmp.ne.s32.totalorder %s143, %s159
      %p161 = scmp.eq.s32.totalorder %s25, 0
      %p162 = por %p160, %p161
      %p163 = scmp.le.s32.totalorder 1, %s19
      %p164 = scmp.lt.s32.totalorder %s19, 5
      %p165 = pnand %p163, %p164
      %p166 = pneg %p165
      // Predicated region
      $region9: #{tpu_custom_call.1} parent=5 // pred_check
        _
      $region10: #{tpu_custom_call.1} parent=5 // pred_check_branch
        %168 = sbr.rel (%p165) target = $region12
      $region11: #{tpu_custom_call.1} parent=5 // pred_region
        %s169 = ssub.s32 %s19, 1
        // Predicated region
        $region13: #{tpu_custom_call.1} parent=11 // pred_check
          %p170 = pneg %p66
        $region14: #{tpu_custom_call.1} parent=11 // pred_check_branch
          %172 = sbr.rel (%p170) target = $region16
        $region15: #{tpu_custom_call.1} parent=11 // pred_region
          %174 = vsyncadd [#allocation6], 0
          %s175 = sshll.u32 %s1, 4
          %s176 = int_to_ptr.hbm [resolvable:$true] %s175
          %s177 = sshll.u32 [#allocation5], 4
          %s178 = int_to_ptr.vmem [resolvable:$true] %s177
          %183 = dma.hbm_to_vmem [thread:$0]  %s176, 2048, %s178, [#allocation6], 128, 128, 8
        $region16: #{tpu_custom_call.1} parent=11 // pred_fallthru
          _
        // Predicated region
        $region17: #{tpu_custom_call.1} parent=11 // pred_check
          %p184 = pneg %p87
        $region18: #{tpu_custom_call.1} parent=11 // pred_check_branch
          %186 = sbr.rel (%p184) target = $region20
        $region19: #{tpu_custom_call.1} parent=11 // pred_region
          %188 = vsyncadd [#allocation6], 0
          %s190 = sshll.u32 %s2, 4
          %s191 = int_to_ptr.hbm [resolvable:$true] %s190
          %s192 = sshll.u32 [#allocation7], 4
          %s193 = int_to_ptr.vmem [resolvable:$true] %s192
          %195 = dma.hbm_to_vmem [thread:$0]  %s191, 32, %s193, [#allocation6]
        $region20: #{tpu_custom_call.1} parent=11 // pred_fallthru
          _
        // Predicated region
        $region21: #{tpu_custom_call.1} parent=11 // pred_check
          %p196 = pneg %p108
        $region22: #{tpu_custom_call.1} parent=11 // pred_check_branch
          %198 = sbr.rel (%p196) target = $region24
        $region23: #{tpu_custom_call.1} parent=11 // pred_region
          %200 = vsyncadd [#allocation9], 0
          %s201 = sshll.u32 %s3, 4
          %s202 = int_to_ptr.hbm [resolvable:$true] %s201
          %s203 = sshll.u32 [#allocation8], 4
          %s204 = int_to_ptr.vmem [resolvable:$true] %s203
          %209 = dma.hbm_to_vmem [thread:$0]  %s202, 2048, %s204, [#allocation9], 64, 64, 4
        $region24: #{tpu_custom_call.1} parent=11 // pred_fallthru
          _
        // Predicated region
        $region25: #{tpu_custom_call.1} parent=11 // pred_check
          %p210 = pneg %p129
        $region26: #{tpu_custom_call.1} parent=11 // pred_check_branch
          %212 = sbr.rel (%p210) target = $region28
        $region27: #{tpu_custom_call.1} parent=11 // pred_region
          _
        $region28: #{tpu_custom_call.1} parent=11 // pred_fallthru
          _
      $region12: #{tpu_custom_call.1} parent=5 // pred_fallthru
        _
      %p213 = scmp.lt.s32.totalorder %s19, 4
      // Predicated region
      $region29: #{tpu_custom_call.1} parent=5 // pred_check
        %p214 = pneg %p213
      $region30: #{tpu_custom_call.1} parent=5 // pred_check_branch
        %216 = sbr.rel (%p214) target = $region32
      $region31: #{tpu_custom_call.1} parent=5 // pred_region
        // Predicated region
        $region33: #{tpu_custom_call.1} parent=31 // pred_check
          %p217 = pneg %p39
        $region34: #{tpu_custom_call.1} parent=31 // pred_check_branch
          %219 = sbr.rel (%p217) target = $region36
        $region35: #{tpu_custom_call.1} parent=31 // pred_region
          %s220 = sand.u32 %s29, 1
          %s221 = scalar_lea.sflag [#allocation3], %s220
          %s222 = sand.u32 %s29, 1
          %s223 = smul.addr %s222, 64
          %s224 = scalar_lea.vmem [#allocation2], %s223
          %s225 = smul.u32 8, %s19
          %227 = vsyncadd %s221, 0
          %s228 = smul.addr %s225, 8
          %s229 = scalar_lea.hbm %s0, %s228
          %s230 = sshll.u32 %s229, 4
          %s231 = int_to_ptr.hbm [resolvable:$true] %s230
          %s232 = sshll.u32 %s224, 4
          %s233 = int_to_ptr.vmem [resolvable:$true] %s232
          %238 = dma.hbm_to_vmem [thread:$0]  %s231, 1024, %s233, %s221, 128, 128, 8
        $region36: #{tpu_custom_call.1} parent=31 // pred_fallthru
          _
      $region32: #{tpu_custom_call.1} parent=5 // pred_fallthru
        _
      %p239 = scmp.le.s32.totalorder 1, %s19
      %p240 = scmp.lt.s32.totalorder %s19, 5
      %p241 = pnand %p239, %p240
      %p242 = pneg %p241
      // Predicated region
      $region37: #{tpu_custom_call.1} parent=5 // pred_check
        _
      $region38: #{tpu_custom_call.1} parent=5 // pred_check_branch
        %244 = sbr.rel (%p241) target = $region40
      $region39: #{tpu_custom_call.1} parent=5 // pred_region
        %s245 = ssub.s32 %s19, 1
        %s246 = sand.u32 %s32, 1
        %s247 = scalar_lea.sflag [#allocation3], %s246
        %s248 = sand.u32 %s32, 1
        %s249 = smul.addr %s248, 64
        %s250 = scalar_lea.vmem [#allocation2], %s249
        // Predicated region
        $region41: #{tpu_custom_call.1} parent=39 // pred_check
          %p251 = pneg %p45
        $region42: #{tpu_custom_call.1} parent=39 // pred_check_branch
          %253 = sbr.rel (%p251) target = $region44
        $region43: #{tpu_custom_call.1} parent=39 // pred_region
          %255 = dma.done %s247, 1024
        $region44: #{tpu_custom_call.1} parent=39 // pred_fallthru
          _
        // Predicated region
        $region45: #{tpu_custom_call.1} parent=39 // pred_check
          %p256 = pneg %p66
        $region46: #{tpu_custom_call.1} parent=39 // pred_check_branch
          %258 = sbr.rel (%p256) target = $region48
        $region47: #{tpu_custom_call.1} parent=39 // pred_region
          %260 = dma.done [#allocation6], 2048
        $region48: #{tpu_custom_call.1} parent=39 // pred_fallthru
          _
        // Predicated region
        $region49: #{tpu_custom_call.1} parent=39 // pred_check
          %p261 = pneg %p87
        $region50: #{tpu_custom_call.1} parent=39 // pred_check_branch
          %263 = sbr.rel (%p261) target = $region52
        $region51: #{tpu_custom_call.1} parent=39 // pred_region
          %265 = dma.done [#allocation6], 32
        $region52: #{tpu_custom_call.1} parent=39 // pred_fallthru
          _
        // Predicated region
        $region53: #{tpu_custom_call.1} parent=39 // pred_check
          %p266 = pneg %p108
        $region54: #{tpu_custom_call.1} parent=39 // pred_check_branch
          %268 = sbr.rel (%p266) target = $region56
        $region55: #{tpu_custom_call.1} parent=39 // pred_region
          %270 = dma.done [#allocation9], 2048
        $region56: #{tpu_custom_call.1} parent=39 // pred_fallthru
          _
        %s271 = sand.u32 %s32, 1
        %s272 = scalar_lea.sflag [#allocation3], %s271
        %s273 = sand.u32 %s32, 1
        %s274 = smul.addr %s273, 64
        %s275 = scalar_lea.vmem [#allocation2], %s274
        %p276 = pneg %p45
        %p277 = pneg %p42
        %p278 = pneg %p66
        %p279 = pneg %p63
        %p280 = pneg %p87
        %p281 = pneg %p84
        %p282 = pneg %p108
        %p283 = pneg %p105
        %p284 = pneg %p129
        %p285 = pneg %p126
        %p286 = pneg %p155
        %p287 = pneg %p152
        %s288 = sand.u32 %s142, 1
        %s289 = scalar_lea.sflag [#allocation4], %s288
        %s290 = sand.u32 %s142, 1
        %s291 = smul.addr %s290, 64
        %s292 = scalar_lea.vmem [#allocation10], %s291
        %s293 = smul.u32 8, %s24
        %s294 = smul.u32 8, %s24
        %v295 = vld [vmem:[%s250] sm:$0xff]
        %v296 = vld [vmem:[%s250 + $0x8] sm:$0xff]
        %v297 = vld [vmem:[%s250 + $0x10] sm:$0xff]
        %v298 = vld [vmem:[%s250 + $0x18] sm:$0xff]
        %v299 = vld [vmem:[%s250 + $0x20] sm:$0xff]
        %v300 = vld [vmem:[%s250 + $0x28] sm:$0xff]
        %v301 = vld [vmem:[%s250 + $0x30] sm:$0xff]
        %v302 = vld [vmem:[%s250 + $0x38] sm:$0xff]
        %v303 = vpack.c.bf16 %v296, %v295
        %v304 = vpack.c.bf16 %v298, %v297
        %v305 = vpack.c.bf16 %v300, %v299
        %v306 = vpack.c.bf16 %v302, %v301
        %v307 = vld [vmem:[#allocation5] sm:$0xff]
        %v308 = vld [vmem:[#allocation5 + $0x8] sm:$0xff]
        %v309 = vld [vmem:[#allocation5 + $0x10] sm:$0xff]
        %v310 = vld [vmem:[#allocation5 + $0x18] sm:$0xff]
        %v311 = vld [vmem:[#allocation5 + $0x20] sm:$0xff]
        %v312 = vld [vmem:[#allocation5 + $0x28] sm:$0xff]
        %v313 = vld [vmem:[#allocation5 + $0x30] sm:$0xff]
        %v314 = vld [vmem:[#allocation5 + $0x38] sm:$0xff]
        %v315 = vld [vmem:[#allocation5 + $0x40] sm:$0xff]
        %v316 = vld [vmem:[#allocation5 + $0x48] sm:$0xff]
        %v317 = vld [vmem:[#allocation5 + $0x50] sm:$0xff]
        %v318 = vld [vmem:[#allocation5 + $0x58] sm:$0xff]
        %v319 = vld [vmem:[#allocation5 + $0x60] sm:$0xff]
        %v320 = vld [vmem:[#allocation5 + $0x68] sm:$0xff]
        %v321 = vld [vmem:[#allocation5 + $0x70] sm:$0xff]
        %v322 = vld [vmem:[#allocation5 + $0x78] sm:$0xff]
        %v323 = vld [vmem:[#allocation7] sm:$0x3]
        %v325 = vperm.slane %v323, 0
        %v326 = vperm.slane %v323, 1
        %v345 = vunpack.c.l.b16 %v307
        %v346 = vunpack.c.h.b16 %v307
        %v347 = vunpack.c.l.b16 %v308
        %v348 = vunpack.c.h.b16 %v308
        %v349 = vunpack.c.l.b16 %v309
        %v350 = vunpack.c.h.b16 %v309
        %v351 = vunpack.c.l.b16 %v310
        %v352 = vunpack.c.h.b16 %v310
        %v353 = vunpack.c.l.b16 %v311
        %v354 = vunpack.c.h.b16 %v311
        %v355 = vunpack.c.l.b16 %v312
        %v356 = vunpack.c.h.b16 %v312
        %v357 = vunpack.c.l.b16 %v313
        %v358 = vunpack.c.h.b16 %v313
        %v359 = vunpack.c.l.b16 %v314
        %v360 = vunpack.c.h.b16 %v314
        %v361 = vunpack.c.l.b16 %v315
        %v362 = vunpack.c.h.b16 %v315
        %v363 = vunpack.c.l.b16 %v316
        %v364 = vunpack.c.h.b16 %v316
        %v365 = vunpack.c.l.b16 %v317
        %v366 = vunpack.c.h.b16 %v317
        %v367 = vunpack.c.l.b16 %v318
        %v368 = vunpack.c.h.b16 %v318
        %v369 = vunpack.c.l.b16 %v319
        %v370 = vunpack.c.h.b16 %v319
        %v371 = vunpack.c.l.b16 %v320
        %v372 = vunpack.c.h.b16 %v320
        %v373 = vunpack.c.l.b16 %v321
        %v374 = vunpack.c.h.b16 %v321
        %v375 = vunpack.c.l.b16 %v322
        %v376 = vunpack.c.h.b16 %v322
        %v377 = vpack.c.b16 %v347, %v345
        %v378 = vpack.c.b16 %v348, %v346
        %v379 = vpack.c.b16 %v351, %v349
        %v380 = vpack.c.b16 %v352, %v350
        %v381 = vpack.c.b16 %v355, %v353
        %v382 = vpack.c.b16 %v356, %v354
        %v383 = vpack.c.b16 %v359, %v357
        %v384 = vpack.c.b16 %v360, %v358
        %v385 = vpack.c.b16 %v363, %v361
        %v386 = vpack.c.b16 %v364, %v362
        %v387 = vpack.c.b16 %v367, %v365
        %v388 = vpack.c.b16 %v368, %v366
        %v389 = vpack.c.b16 %v371, %v369
        %v390 = vpack.c.b16 %v372, %v370
        %v391 = vpack.c.b16 %v375, %v373
        %v392 = vpack.c.b16 %v376, %v374
        %409 = vmatpush.bf16.msra.mxu0 %v391
        %410 = vmatpush.bf16.msra.mxu0 %v389
        %411 = vmatpush.bf16.msra.mxu0 %v387
        %412 = vmatpush.bf16.msra.mxu0 %v385
        %413 = vmatpush.bf16.msra.mxu0 %v383
        %414 = vmatpush.bf16.msra.mxu0 %v381
        %415 = vmatpush.bf16.msra.mxu0 %v379
        %416 = vmatpush.bf16.msra.mxu0 %v377
        %417 = vmatmul.bf16.gmra.mxu0 %v303
        %v418 = vpop.f32.mrf.mxu0
        %v419 = vadd.f32 %v325, %v418
        %v420 = vpop.f32.mrf.mxu0
        %v421 = vadd.f32 %v325, %v420
        %422 = vmatmul.bf16.gmra.mxu0 %v304
        %v423 = vpop.f32.mrf.mxu0
        %v424 = vadd.f32 %v325, %v423
        %v425 = vpop.f32.mrf.mxu0
        %v426 = vadd.f32 %v325, %v425
        %427 = vmatmul.bf16.gmra.mxu0 %v305
        %v428 = vpop.f32.mrf.mxu0
        %v429 = vadd.f32 %v325, %v428
        %v430 = vpop.f32.mrf.mxu0
        %v431 = vadd.f32 %v325, %v430
        %432 = vmatmul.bf16.gmra.mxu0 %v306
        %v433 = vpop.f32.mrf.mxu0
        %v434 = vadd.f32 %v325, %v433
        %v435 = vpop.f32.mrf.mxu0
        %v436 = vadd.f32 %v325, %v435
        %437 = vdwg.mxu0
        %438 = vmatpush.bf16.msra.mxu0 %v392
        %439 = vmatpush.bf16.msra.mxu0 %v390
        %440 = vmatpush.bf16.msra.mxu0 %v388
        %441 = vmatpush.bf16.msra.mxu0 %v386
        %442 = vmatpush.bf16.msra.mxu0 %v384
        %443 = vmatpush.bf16.msra.mxu0 %v382
        %444 = vmatpush.bf16.msra.mxu0 %v380
        %445 = vmatpush.bf16.msra.mxu0 %v378
        %446 = vmatmul.bf16.gmra.mxu0 %v303
        %v447 = vpop.f32.mrf.mxu0
        %v448 = vadd.f32 %v326, %v447
        %v449 = vpop.f32.mrf.mxu0
        %v450 = vadd.f32 %v326, %v449
        %451 = vmatmul.bf16.gmra.mxu0 %v304
        %v452 = vpop.f32.mrf.mxu0
        %v453 = vadd.f32 %v326, %v452
        %v454 = vpop.f32.mrf.mxu0
        %v455 = vadd.f32 %v326, %v454
        %456 = vmatmul.bf16.gmra.mxu0 %v305
        %v457 = vpop.f32.mrf.mxu0
        %v458 = vadd.f32 %v326, %v457
        %v459 = vpop.f32.mrf.mxu0
        %v460 = vadd.f32 %v326, %v459
        %461 = vmatmul.bf16.gmra.mxu0 %v306
        %v462 = vpop.f32.mrf.mxu0
        %v463 = vadd.f32 %v326, %v462
        %v464 = vpop.f32.mrf.mxu0
        %v465 = vadd.f32 %v326, %v464
        %466 = vdwg.mxu0
        %v467 = vmax.f32 %v419, 0.0
        %v468 = vmax.f32 %v448, 0.0
        %v469 = vmax.f32 %v421, 0.0
        %v470 = vmax.f32 %v450, 0.0
        %v471 = vmax.f32 %v424, 0.0
        %v472 = vmax.f32 %v453, 0.0
        %v473 = vmax.f32 %v426, 0.0
        %v474 = vmax.f32 %v455, 0.0
        %v475 = vmax.f32 %v429, 0.0
        %v476 = vmax.f32 %v458, 0.0
        %v477 = vmax.f32 %v431, 0.0
        %v478 = vmax.f32 %v460, 0.0
        %v479 = vmax.f32 %v434, 0.0
        %v480 = vmax.f32 %v463, 0.0
        %v481 = vmax.f32 %v436, 0.0
        %v482 = vmax.f32 %v465, 0.0
        %v483 = vpack.c.bf16 %v469, %v467
        %v484 = vpack.c.bf16 %v470, %v468
        %v485 = vpack.c.bf16 %v473, %v471
        %v486 = vpack.c.bf16 %v474, %v472
        %v487 = vpack.c.bf16 %v477, %v475
        %v488 = vpack.c.bf16 %v478, %v476
        %v489 = vpack.c.bf16 %v481, %v479
        %v490 = vpack.c.bf16 %v482, %v480
        %v491 = vld [vmem:[#allocation8] sm:$0xf]
        %v492 = vld [vmem:[#allocation8 + $0x4] sm:$0xf]
        %v493 = vld [vmem:[#allocation8 + $0x8] sm:$0xf]
        %v494 = vld [vmem:[#allocation8 + $0xc] sm:$0xf]
        %v495 = vld [vmem:[#allocation8 + $0x10] sm:$0xf]
        %v496 = vld [vmem:[#allocation8 + $0x14] sm:$0xf]
        %v497 = vld [vmem:[#allocation8 + $0x18] sm:$0xf]
        %v498 = vld [vmem:[#allocation8 + $0x1c] sm:$0xf]
        %v499 = vld [vmem:[#allocation8 + $0x20] sm:$0xf]
        %v500 = vld [vmem:[#allocation8 + $0x24] sm:$0xf]
        %v501 = vld [vmem:[#allocation8 + $0x28] sm:$0xf]
        %v502 = vld [vmem:[#allocation8 + $0x2c] sm:$0xf]
        %v503 = vld [vmem:[#allocation8 + $0x30] sm:$0xf]
        %v504 = vld [vmem:[#allocation8 + $0x34] sm:$0xf]
        %v505 = vld [vmem:[#allocation8 + $0x38] sm:$0xf]
        %v506 = vld [vmem:[#allocation8 + $0x3c] sm:$0xf]
        %v507 = vld [vmem:[#allocation8 + $0x40] sm:$0xf]
        %v508 = vld [vmem:[#allocation8 + $0x44] sm:$0xf]
        %v509 = vld [vmem:[#allocation8 + $0x48] sm:$0xf]
        %v510 = vld [vmem:[#allocation8 + $0x4c] sm:$0xf]
        %v511 = vld [vmem:[#allocation8 + $0x50] sm:$0xf]
        %v512 = vld [vmem:[#allocation8 + $0x54] sm:$0xf]
        %v513 = vld [vmem:[#allocation8 + $0x58] sm:$0xf]
        %v514 = vld [vmem:[#allocation8 + $0x5c] sm:$0xf]
        %v515 = vld [vmem:[#allocation8 + $0x60] sm:$0xf]
        %v516 = vld [vmem:[#allocation8 + $0x64] sm:$0xf]
        %v517 = vld [vmem:[#allocation8 + $0x68] sm:$0xf]
        %v518 = vld [vmem:[#allocation8 + $0x6c] sm:$0xf]
        %v519 = vld [vmem:[#allocation8 + $0x70] sm:$0xf]
        %v520 = vld [vmem:[#allocation8 + $0x74] sm:$0xf]
        %v521 = vld [vmem:[#allocation8 + $0x78] sm:$0xf]
        %v522 = vld [vmem:[#allocation8 + $0x7c] sm:$0xf]
        %v523 = vld [vmem:[%s4] sm:$0x1]
        %v525 = vperm.slane %v523, 0
        %v559 = vunpack.c.l.b16 %v491
        %v560 = vunpack.c.l.b16 %v492
        %v561 = vunpack.c.l.b16 %v493
        %v562 = vunpack.c.l.b16 %v494
        %v563 = vunpack.c.l.b16 %v495
        %v564 = vunpack.c.l.b16 %v496
        %v565 = vunpack.c.l.b16 %v497
        %v566 = vunpack.c.l.b16 %v498
        %v567 = vunpack.c.l.b16 %v499
        %v568 = vunpack.c.l.b16 %v500
        %v569 = vunpack.c.l.b16 %v501
        %v570 = vunpack.c.l.b16 %v502
        %v571 = vunpack.c.l.b16 %v503
        %v572 = vunpack.c.l.b16 %v504
        %v573 = vunpack.c.l.b16 %v505
        %v574 = vunpack.c.l.b16 %v506
        %v575 = vunpack.c.l.b16 %v507
        %v576 = vunpack.c.l.b16 %v508
        %v577 = vunpack.c.l.b16 %v509
        %v578 = vunpack.c.l.b16 %v510
        %v579 = vunpack.c.l.b16 %v511
        %v580 = vunpack.c.l.b16 %v512
        %v581 = vunpack.c.l.b16 %v513
        %v582 = vunpack.c.l.b16 %v514
        %v583 = vunpack.c.l.b16 %v515
        %v584 = vunpack.c.l.b16 %v516
        %v585 = vunpack.c.l.b16 %v517
        %v586 = vunpack.c.l.b16 %v518
        %v587 = vunpack.c.l.b16 %v519
        %v588 = vunpack.c.l.b16 %v520
        %v589 = vunpack.c.l.b16 %v521
        %v590 = vunpack.c.l.b16 %v522
        %v591 = vpack.c.b16 %v560, %v559
        %v592 = vpack.c.b16 %v562, %v561
        %v593 = vpack.c.b16 %v564, %v563
        %v594 = vpack.c.b16 %v566, %v565
        %v595 = vpack.c.b16 %v568, %v567
        %v596 = vpack.c.b16 %v570, %v569
        %v597 = vpack.c.b16 %v572, %v571
        %v598 = vpack.c.b16 %v574, %v573
        %v599 = vpack.c.b16 %v576, %v575
        %v600 = vpack.c.b16 %v578, %v577
        %v601 = vpack.c.b16 %v580, %v579
        %v602 = vpack.c.b16 %v582, %v581
        %v603 = vpack.c.b16 %v584, %v583
        %v604 = vpack.c.b16 %v586, %v585
        %v605 = vpack.c.b16 %v588, %v587
        %v606 = vpack.c.b16 %v590, %v589
        %623 = vmatpush.bf16.msra.mxu0 %v598
        %624 = vmatpush.bf16.msra.mxu0 %v597
        %625 = vmatpush.bf16.msra.mxu0 %v596
        %626 = vmatpush.bf16.msra.mxu0 %v595
        %627 = vmatpush.bf16.msra.mxu0 %v594
        %628 = vmatpush.bf16.msra.mxu0 %v593
        %629 = vmatpush.bf16.msra.mxu0 %v592
        %630 = vmatpush.bf16.msra.mxu0 %v591
        %631 = vmatmul.bf16.gmra.mxu0 %v483
        %v632 = vpop.f32.mrf.mxu0
        %v633 = vadd.f32 %v525, %v632
        %v634 = vpop.f32.mrf.mxu0
        %v635 = vadd.f32 %v525, %v634
        %636 = vmatmul.bf16.gmra.mxu0 %v485
        %v637 = vpop.f32.mrf.mxu0
        %v638 = vadd.f32 %v525, %v637
        %v639 = vpop.f32.mrf.mxu0
        %v640 = vadd.f32 %v525, %v639
        %641 = vmatmul.bf16.gmra.mxu0 %v487
        %v642 = vpop.f32.mrf.mxu0
        %v643 = vadd.f32 %v525, %v642
        %v644 = vpop.f32.mrf.mxu0
        %v645 = vadd.f32 %v525, %v644
        %646 = vmatmul.bf16.gmra.mxu0 %v489
        %v647 = vpop.f32.mrf.mxu0
        %v648 = vadd.f32 %v525, %v647
        %v649 = vpop.f32.mrf.mxu0
        %v650 = vadd.f32 %v525, %v649
        %651 = vdwg.mxu0
        %652 = vmatpush.bf16.msra.mxu0 %v606
        %653 = vmatpush.bf16.msra.mxu0 %v605
        %654 = vmatpush.bf16.msra.mxu0 %v604
        %655 = vmatpush.bf16.msra.mxu0 %v603
        %656 = vmatpush.bf16.msra.mxu0 %v602
        %657 = vmatpush.bf16.msra.mxu0 %v601
        %658 = vmatpush.bf16.msra.mxu0 %v600
        %659 = vmatpush.bf16.msra.mxu0 %v599
        %660 = vmatmul.bf16.gmra.mxu0 %v484
        %v661 = vpop.f32.mrf.mxu0
        %v662 = vadd.f32 %v633, %v661
        %v663 = vpop.f32.mrf.mxu0
        %v664 = vadd.f32 %v635, %v663
        %665 = vmatmul.bf16.gmra.mxu0 %v486
        %v666 = vpop.f32.mrf.mxu0
        %v667 = vadd.f32 %v638, %v666
        %v668 = vpop.f32.mrf.mxu0
        %v669 = vadd.f32 %v640, %v668
        %670 = vmatmul.bf16.gmra.mxu0 %v488
        %v671 = vpop.f32.mrf.mxu0
        %v672 = vadd.f32 %v643, %v671
        %v673 = vpop.f32.mrf.mxu0
        %v674 = vadd.f32 %v645, %v673
        %675 = vmatmul.bf16.gmra.mxu0 %v490
        %v676 = vpop.f32.mrf.mxu0
        %v677 = vadd.f32 %v648, %v676
        %v678 = vpop.f32.mrf.mxu0
        %v679 = vadd.f32 %v650, %v678
        %680 = vdwg.mxu0
        %v681 = vadd.f32 %v295, %v662
        %v682 = vadd.f32 %v296, %v664
        %v683 = vadd.f32 %v297, %v667
        %v684 = vadd.f32 %v298, %v669
        %v685 = vadd.f32 %v299, %v672
        %v686 = vadd.f32 %v300, %v674
        %v687 = vadd.f32 %v301, %v677
        %v688 = vadd.f32 %v302, %v679
        %689 = vst [vmem:[%s292] sm:$0xff] %v681
        %690 = vst [vmem:[%s292 + $0x8] sm:$0xff] %v682
        %691 = vst [vmem:[%s292 + $0x10] sm:$0xff] %v683
        %692 = vst [vmem:[%s292 + $0x18] sm:$0xff] %v684
        %693 = vst [vmem:[%s292 + $0x20] sm:$0xff] %v685
        %694 = vst [vmem:[%s292 + $0x28] sm:$0xff] %v686
        %695 = vst [vmem:[%s292 + $0x30] sm:$0xff] %v687
        %696 = vst [vmem:[%s292 + $0x38] sm:$0xff] %v688
        %s697 = sand.u32 %s142, 1
        %s698 = scalar_lea.sflag [#allocation4], %s697
        %s699 = sand.u32 %s142, 1
        %s700 = smul.addr %s699, 64
        %s701 = scalar_lea.vmem [#allocation10], %s700
        // Predicated region
        $region57: #{tpu_custom_call.1} parent=39 // pred_check
          %p702 = pneg %p152
        $region58: #{tpu_custom_call.1} parent=39 // pred_check_branch
          %704 = sbr.rel (%p702) target = $region60
        $region59: #{tpu_custom_call.1} parent=39 // pred_region
          %s705 = smul.u32 8, %s24
          %707 = vsyncadd %s698, 0
          %s708 = smul.addr %s705, 8
          %s709 = scalar_lea.hbm %s5, %s708
          %s710 = sshll.u32 %s701, 4
          %s711 = int_to_ptr.vmem [resolvable:$true] %s710
          %s712 = sshll.u32 %s709, 4
          %s713 = int_to_ptr.hbm [resolvable:$true] %s712
          %718 = dma.vmem_to_hbm [thread:$0]  %s711, 1024, %s713, %s698, 128, 128, 8
        $region60: #{tpu_custom_call.1} parent=39 // pred_fallthru
          _
      $region40: #{tpu_custom_call.1} parent=5 // pred_fallthru
        _
      %p719 = scmp.le.s32.totalorder 2, %s19
      // Predicated region
      $region61: #{tpu_custom_call.1} parent=5 // pred_check
        %p720 = pneg %p719
      $region62: #{tpu_custom_call.1} parent=5 // pred_check_branch
        %722 = sbr.rel (%p720) target = $region64
      $region63: #{tpu_custom_call.1} parent=5 // pred_region
        %s723 = ssub.s32 %s19, 2
        // Predicated region
        $region65: #{tpu_custom_call.1} parent=63 // pred_check
          %p724 = pneg %p158
        $region66: #{tpu_custom_call.1} parent=63 // pred_check_branch
          %726 = sbr.rel (%p724) target = $region68
        $region67: #{tpu_custom_call.1} parent=63 // pred_region
          %s727 = sand.u32 %s143, 1
          %s728 = scalar_lea.sflag [#allocation4], %s727
          %s729 = sand.u32 %s143, 1
          %s730 = smul.addr %s729, 64
          %s731 = scalar_lea.vmem [#allocation10], %s730
          %733 = dma.done %s728, 1024
        $region68: #{tpu_custom_call.1} parent=63 // pred_fallthru
          _
      $region64: #{tpu_custom_call.1} parent=5 // pred_fallthru
        _
    $region6: #{tpu_custom_call.1} parent=1 // loop_footer
      %s23 = sadd.s32 1, %s19
    $region7: #{tpu_custom_call.1} parent=1 // loop_footer_branch
      %18 = sbr.rel target = $region3
    $region8: #{tpu_custom_call.1} parent=1 // loop_exit
      _
    %734 = vsyncpa [#allocation3], 1
    %s735 = scalar_lea.sflag [#allocation3], 1
    %736 = vsyncpa %s735, 1
    %737 = vsyncpa [#allocation6], 1
    %738 = vsyncpa [#allocation9], 1
    %739 = vsyncpa [#allocation4], 1
    %s740 = scalar_lea.sflag [#allocation4], 1
    %741 = vsyncpa %s740, 1

// kernel: tpu_custom_call.1
$region0: #{tpu_custom_call.1}
  #allocation0 [shape = 'u32[]', space=smem, size = 0x4, offset = 0x4, fixed_abs, tag = 'smem constant byte address 0x4 - core index']
  #allocation1 [shape = 'u32[72,128]{1,0:T(1,128)}', space=vmem, size = 0x9000, scoped, tag = 'internal scratch']
  %s0 = inlined_call_operand.hbm [shape: f32[256,128], index: 0, kind: input, shape index: {}]
  %s1 = inlined_call_operand.hbm [shape: bf16[128,256], index: 1, kind: input, shape index: {}]
  %s2 = inlined_call_operand.hbm [shape: f32[1,256], index: 2, kind: input, shape index: {}]
  %s3 = inlined_call_operand.hbm [shape: bf16[256,128], index: 3, kind: input, shape index: {}]
  %s4 = inlined_call_operand.vmem [shape: f32[1,128], index: 4, kind: input, shape index: {}]
  %s5 = inlined_call_operand.hbm [shape: f32[256,128], index: 5, kind: output, shape index: {}]
  %s6 = sld [smem:[#allocation0]]
  $region69: #{tpu_custom_call.1} parent=0
    _
  %s8 = ssub.s32 1, %s6
  %s9 = scalar_select 0, %s8, %s6
  $region1: #{tpu_custom_call.1} parent=0
    #allocation2 [shape = 'u8[65536]{0}', space=vmem, size = 0x10000, scoped, tag = 'input window, operand 0']
    #allocation3 [shape = 's32[2]{0}', space=sflag, size = 0x8, scoped, tag = 'scoped memory for tpu_custom_call.1']
    #allocation4 [shape = 's32[2]{0}', space=sflag, size = 0x8, scoped, tag = 'scoped memory for tpu_custom_call.1']
    #allocation5 [shape = 'u8[65536]{0}', space=vmem, size = 0x10000, scoped, tag = 'input window, operand 1, single buffered']
    #allocation6 [shape = 's32[1]{0}', space=sflag, size = 0x4, scoped, tag = 'scoped memory for tpu_custom_call.1']
    #allocation7 [shape = 'u8[1024]{0}', space=vmem, size = 0x400, scoped, tag = 'input window, operand 2, single buffered']
    #allocation8 [shape = 'u8[65536]{0}', space=vmem, size = 0x10000, scoped, tag = 'input window, operand 3, single buffered']
    #allocation9 [shape = 's32[1]{0}', space=sflag, size = 0x4, scoped, tag = 'scoped memory for tpu_custom_call.1']
    #allocation10 [shape = 'u8[65536]{0}', space=vmem, size = 0x10000, scoped, tag = 'output window, operand 0']
    %10 = vsyncpa [#allocation3], 0
    %s11 = scalar_lea.sflag [#allocation3], 1
    %12 = vsyncpa %s11, 0
    %13 = vsyncpa [#allocation6], 0
    %14 = vsyncpa [#allocation9], 0
    %15 = vsyncpa [#allocation4], 0
    %s16 = scalar_lea.sflag [#allocation4], 1
    %17 = vsyncpa %s16, 0
    loop: start=0, step=1, limit=6
    $region2: #{tpu_custom_call.1} parent=1 // loop_pre_header
      _
    $region3: #{tpu_custom_call.1} parent=1 // loop_header
      %s19 = sphi 0, %s23
      %p20 = scmp.ge.s32.totalorder %s19, 6
      %s29 = sphi 0, %s31
      %s32 = sphi 0, %s29
      %s33 = sphi 0, %s32
      %s49 = sphi 0, %s33
      %s53 = sphi 0, %s53
      %s55 = sphi 0, %s53
      %s56 = sphi 0, %s55
      %s70 = sphi 0, %s56
      %s74 = sphi 0, %s74
      %s76 = sphi 0, %s74
      %s77 = sphi 0, %s76
      %s91 = sphi 0, %s77
      %s95 = sphi 0, %s95
      %s97 = sphi 0, %s95
      %s98 = sphi 0, %s97
      %s112 = sphi 0, %s98
      %s116 = sphi 0, %s116
      %s118 = sphi 0, %s116
      %s119 = sphi 0, %s118
      %s133 = sphi 0, %s119
      %s139 = sphi 0, %s141
      %s142 = sphi 0, %s139
      %s143 = sphi 0, %s142
      %s159 = sphi 0, %s143
    $region4: #{tpu_custom_call.1} parent=1 // loop_header_branch
      %22 = sbr.rel (%p20) target = $region8
    $region5: #{tpu_custom_call.1} parent=1 // loop_body
      %s24 = ssub.s32 %s19, 1
      %s25 = ssub.s32 %s19, 2
      %s26 = sadd.s32 %s19, 1
      %s27 = ssub.s32 %s19, %s26
      %p28 = scmp.eq.s32.totalorder %s27, 0
      %s30 = sadd.s32 %s29, 1
      %s31 = scalar_select %p28, %s29, %s30
      %p34 = pneg %p28
      %p35 = scmp.eq.s32.totalorder %s19, 3
      %p36 = por %p34, %p35
      %p37 = scmp.ne.s32.totalorder %s29, %s32
      %p38 = scmp.eq.s32.totalorder %s19, 0
      %p39 = por %p37, %p38
      %p40 = scmp.ne.s32.totalorder %s29, %s32
      %p41 = scmp.eq.s32.totalorder %s24, 3
      %p42 = por %p40, %p41
      %p43 = scmp.ne.s32.totalorder %s32, %s33
      %p44 = scmp.eq.s32.totalorder %s24, 0
      %p45 = por %p43, %p44
      %p46 = scmp.ne.s32.totalorder %s32, %s33
      %p47 = scmp.eq.s32.totalorder %s25, 3
      %p48 = por %p46, %p47
      %p50 = scmp.ne.s32.totalorder %s33, %s49
      %p51 = scmp.eq.s32.totalorder %s25, 0
      %p52 = por %p50, %p51
      %s54 = sadd.s32 %s53, 1
      %p57 = scmp.eq.s32.totalorder %s19, 3
      %p58 = scmp.ne.s32.totalorder %s53, %s55
      %p59 = scmp.eq.s32.totalorder %s19, 0
      %p60 = por %p58, %p59
      %p61 = scmp.ne.s32.totalorder %s53, %s55
      %p62 = scmp.eq.s32.totalorder %s24, 3
      %p63 = por %p61, %p62
      %p64 = scmp.ne.s32.totalorder %s55, %s56
      %p65 = scmp.eq.s32.totalorder %s24, 0
      %p66 = por %p64, %p65
      %p67 = scmp.ne.s32.totalorder %s55, %s56
      %p68 = scmp.eq.s32.totalorder %s25, 3
      %p69 = por %p67, %p68
      %p71 = scmp.ne.s32.totalorder %s56, %s70
      %p72 = scmp.eq.s32.totalorder %s25, 0
      %p73 = por %p71, %p72
      %s75 = sadd.s32 %s74, 1
      %p78 = scmp.eq.s32.totalorder %s19, 3
      %p79 = scmp.ne.s32.totalorder %s74, %s76
      %p80 = scmp.eq.s32.totalorder %s19, 0
      %p81 = por %p79, %p80
      %p82 = scmp.ne.s32.totalorder %s74, %s76
      %p83 = scmp.eq.s32.totalorder %s24, 3
      %p84 = por %p82, %p83
      %p85 = scmp.ne.s32.totalorder %s76, %s77
      %p86 = scmp.eq.s32.totalorder %s24, 0
      %p87 = por %p85, %p86
      %p88 = scmp.ne.s32.totalorder %s76, %s77
      %p89 = scmp.eq.s32.totalorder %s25, 3
      %p90 = por %p88, %p89
      %p92 = scmp.ne.s32.totalorder %s77, %s91
      %p93 = scmp.eq.s32.totalorder %s25, 0
      %p94 = por %p92, %p93
      %s96 = sadd.s32 %s95, 1
      %p99 = scmp.eq.s32.totalorder %s19, 3
      %p100 = scmp.ne.s32.totalorder %s95, %s97
      %p101 = scmp.eq.s32.totalorder %s19, 0
      %p102 = por %p100, %p101
      %p103 = scmp.ne.s32.totalorder %s95, %s97
      %p104 = scmp.eq.s32.totalorder %s24, 3
      %p105 = por %p103, %p104
      %p106 = scmp.ne.s32.totalorder %s97, %s98
      %p107 = scmp.eq.s32.totalorder %s24, 0
      %p108 = por %p106, %p107
      %p109 = scmp.ne.s32.totalorder %s97, %s98
      %p110 = scmp.eq.s32.totalorder %s25, 3
      %p111 = por %p109, %p110
      %p113 = scmp.ne.s32.totalorder %s98, %s112
      %p114 = scmp.eq.s32.totalorder %s25, 0
      %p115 = por %p113, %p114
      %s117 = sadd.s32 %s116, 1
      %p120 = scmp.eq.s32.totalorder %s19, 3
      %p121 = scmp.ne.s32.totalorder %s116, %s118
      %p122 = scmp.eq.s32.totalorder %s19, 0
      %p123 = por %p121, %p122
      %p124 = scmp.ne.s32.totalorder %s116, %s118
      %p125 = scmp.eq.s32.totalorder %s24, 3
      %p126 = por %p124, %p125
      %p127 = scmp.ne.s32.totalorder %s118, %s119
      %p128 = scmp.eq.s32.totalorder %s24, 0
      %p129 = por %p127, %p128
      %p130 = scmp.ne.s32.totalorder %s118, %s119
      %p131 = scmp.eq.s32.totalorder %s25, 3
      %p132 = por %p130, %p131
      %p134 = scmp.ne.s32.totalorder %s119, %s133
      %p135 = scmp.eq.s32.totalorder %s25, 0
      %p136 = por %p134, %p135
      %s137 = ssub.s32 %s19, %s26
      %p138 = scmp.eq.s32.totalorder %s137, 0
      %s140 = sadd.s32 %s139, 1
      %s141 = scalar_select %p138, %s139, %s140
      %p144 = pneg %p138
      %p145 = scmp.eq.s32.totalorder %s19, 3
      %p146 = por %p144, %p145
      %p147 = scmp.ne.s32.totalorder %s139, %s142
      %p148 = scmp.eq.s32.totalorder %s19, 0
      %p149 = por %p147, %p148
      %p150 = scmp.ne.s32.totalorder %s139, %s142
      %p151 = scmp.eq.s32.totalorder %s24, 3
      %p152 = por %p150, %p151
      %p153 = scmp.ne.s32.totalorder %s142, %s143
      %p154 = scmp.eq.s32.totalorder %s24, 0
      %p155 = por %p153, %p154
      %p156 = scmp.ne.s32.totalorder %s142, %s143
      %p157 = scmp.eq.s32.totalorder %s25, 3
      %p158 = por %p156, %p157
      %p160 = scmp.ne.s32.totalorder %s143, %s159
      %p161 = scmp.eq.s32.totalorder %s25, 0
      %p162 = por %p160, %p161
      %p163 = scmp.le.s32.totalorder 1, %s19
      %p164 = scmp.lt.s32.totalorder %s19, 5
      %p165 = pnand %p163, %p164
      %p166 = pneg %p165
      // Predicated region
      $region9: #{tpu_custom_call.1} parent=5 // pred_check
        _
      $region10: #{tpu_custom_call.1} parent=5 // pred_check_branch
        %168 = sbr.rel (%p165) target = $region12
      $region11: #{tpu_custom_call.1} parent=5 // pred_region
        %s169 = ssub.s32 %s19, 1
        // Predicated region
        $region13: #{tpu_custom_call.1} parent=11 // pred_check
          %p170 = pneg %p66
        $region14: #{tpu_custom_call.1} parent=11 // pred_check_branch
          %172 = sbr.rel (%p170) target = $region16
        $region15: #{tpu_custom_call.1} parent=11 // pred_region
          %174 = vsyncadd [#allocation6], 0
          %s175 = sshll.u32 %s1, 4
          %s176 = int_to_ptr.hbm [resolvable:$true] %s175
          %s177 = sshll.u32 [#allocation5], 4
          %s178 = int_to_ptr.vmem [resolvable:$true] %s177
          %183 = dma.hbm_to_vmem [thread:$0]  %s176, 2048, %s178, [#allocation6], 128, 128, 8
        $region16: #{tpu_custom_call.1} parent=11 // pred_fallthru
          _
        // Predicated region
        $region17: #{tpu_custom_call.1} parent=11 // pred_check
          %p184 = pneg %p87
        $region18: #{tpu_custom_call.1} parent=11 // pred_check_branch
          %186 = sbr.rel (%p184) target = $region20
        $region19: #{tpu_custom_call.1} parent=11 // pred_region
          %188 = vsyncadd [#allocation6], 0
          %s190 = sshll.u32 %s2, 4
          %s191 = int_to_ptr.hbm [resolvable:$true] %s190
          %s192 = sshll.u32 [#allocation7], 4
          %s193 = int_to_ptr.vmem [resolvable:$true] %s192
          %195 = dma.hbm_to_vmem [thread:$0]  %s191, 32, %s193, [#allocation6]
        $region20: #{tpu_custom_call.1} parent=11 // pred_fallthru
          _
        // Predicated region
        $region21: #{tpu_custom_call.1} parent=11 // pred_check
          %p196 = pneg %p108
        $region22: #{tpu_custom_call.1} parent=11 // pred_check_branch
          %198 = sbr.rel (%p196) target = $region24
        $region23: #{tpu_custom_call.1} parent=11 // pred_region
          %200 = vsyncadd [#allocation9], 0
          %s201 = sshll.u32 %s3, 4
          %s202 = int_to_ptr.hbm [resolvable:$true] %s201
          %s203 = sshll.u32 [#allocation8], 4
          %s204 = int_to_ptr.vmem [resolvable:$true] %s203
          %209 = dma.hbm_to_vmem [thread:$0]  %s202, 2048, %s204, [#allocation9], 64, 64, 4
        $region24: #{tpu_custom_call.1} parent=11 // pred_fallthru
          _
        // Predicated region
        $region25: #{tpu_custom_call.1} parent=11 // pred_check
          %p210 = pneg %p129
        $region26: #{tpu_custom_call.1} parent=11 // pred_check_branch
          %212 = sbr.rel (%p210) target = $region28
        $region27: #{tpu_custom_call.1} parent=11 // pred_region
          _
        $region28: #{tpu_custom_call.1} parent=11 // pred_fallthru
          _
      $region12: #{tpu_custom_call.1} parent=5 // pred_fallthru
        _
      %p213 = scmp.lt.s32.totalorder %s19, 4
      // Predicated region
      $region29: #{tpu_custom_call.1} parent=5 // pred_check
        %p214 = pneg %p213
      $region30: #{tpu_custom_call.1} parent=5 // pred_check_branch
        %216 = sbr.rel (%p214) target = $region32
      $region31: #{tpu_custom_call.1} parent=5 // pred_region
        // Predicated region
        $region33: #{tpu_custom_call.1} parent=31 // pred_check
          %p217 = pneg %p39
        $region34: #{tpu_custom_call.1} parent=31 // pred_check_branch
          %219 = sbr.rel (%p217) target = $region36
        $region35: #{tpu_custom_call.1} parent=31 // pred_region
          %s220 = sand.u32 %s29, 1
          %s221 = scalar_lea.sflag [#allocation3], %s220
          %s222 = sand.u32 %s29, 1
          %s223 = smul.addr %s222, 64
          %s224 = scalar_lea.vmem [#allocation2], %s223
          %s225 = smul.u32 8, %s19
          %227 = vsyncadd %s221, 0
          %s228 = smul.addr %s225, 8
          %s229 = scalar_lea.hbm %s0, %s228
          %s230 = sshll.u32 %s229, 4
          %s231 = int_to_ptr.hbm [resolvable:$true] %s230
          %s232 = sshll.u32 %s224, 4
          %s233 = int_to_ptr.vmem [resolvable:$true] %s232
          %238 = dma.hbm_to_vmem [thread:$0]  %s231, 1024, %s233, %s221, 128, 128, 8
        $region36: #{tpu_custom_call.1} parent=31 // pred_fallthru
          _
      $region32: #{tpu_custom_call.1} parent=5 // pred_fallthru
        _
      %p239 = scmp.le.s32.totalorder 1, %s19
      %p240 = scmp.lt.s32.totalorder %s19, 5
      %p241 = pnand %p239, %p240
      %p242 = pneg %p241
      // Predicated region
      $region37: #{tpu_custom_call.1} parent=5 // pred_check
        _
      $region38: #{tpu_custom_call.1} parent=5 // pred_check_branch
        %244 = sbr.rel (%p241) target = $region40
      $region39: #{tpu_custom_call.1} parent=5 // pred_region
        %s245 = ssub.s32 %s19, 1
        %s246 = sand.u32 %s32, 1
        %s247 = scalar_lea.sflag [#allocation3], %s246
        %s248 = sand.u32 %s32, 1
        %s249 = smul.addr %s248, 64
        %s250 = scalar_lea.vmem [#allocation2], %s249
        // Predicated region
        $region41: #{tpu_custom_call.1} parent=39 // pred_check
          %p251 = pneg %p45
        $region42: #{tpu_custom_call.1} parent=39 // pred_check_branch
          %253 = sbr.rel (%p251) target = $region44
        $region43: #{tpu_custom_call.1} parent=39 // pred_region
          %255 = dma.done %s247, 1024
        $region44: #{tpu_custom_call.1} parent=39 // pred_fallthru
          _
        // Predicated region
        $region45: #{tpu_custom_call.1} parent=39 // pred_check
          %p256 = pneg %p66
        $region46: #{tpu_custom_call.1} parent=39 // pred_check_branch
          %258 = sbr.rel (%p256) target = $region48
        $region47: #{tpu_custom_call.1} parent=39 // pred_region
          %260 = dma.done [#allocation6], 2048
        $region48: #{tpu_custom_call.1} parent=39 // pred_fallthru
          _
        // Predicated region
        $region49: #{tpu_custom_call.1} parent=39 // pred_check
          %p261 = pneg %p87
        $region50: #{tpu_custom_call.1} parent=39 // pred_check_branch
          %263 = sbr.rel (%p261) target = $region52
        $region51: #{tpu_custom_call.1} parent=39 // pred_region
          %265 = dma.done [#allocation6], 32
        $region52: #{tpu_custom_call.1} parent=39 // pred_fallthru
          _
        // Predicated region
        $region53: #{tpu_custom_call.1} parent=39 // pred_check
          %p266 = pneg %p108
        $region54: #{tpu_custom_call.1} parent=39 // pred_check_branch
          %268 = sbr.rel (%p266) target = $region56
        $region55: #{tpu_custom_call.1} parent=39 // pred_region
          %270 = dma.done [#allocation9], 2048
        $region56: #{tpu_custom_call.1} parent=39 // pred_fallthru
          _
        %s271 = sand.u32 %s32, 1
        %s272 = scalar_lea.sflag [#allocation3], %s271
        %s273 = sand.u32 %s32, 1
        %s274 = smul.addr %s273, 64
        %s275 = scalar_lea.vmem [#allocation2], %s274
        %p276 = pneg %p45
        %p277 = pneg %p42
        %p278 = pneg %p66
        %p279 = pneg %p63
        %p280 = pneg %p87
        %p281 = pneg %p84
        %p282 = pneg %p108
        %p283 = pneg %p105
        %p284 = pneg %p129
        %p285 = pneg %p126
        %p286 = pneg %p155
        %p287 = pneg %p152
        %s288 = sand.u32 %s142, 1
        %s289 = scalar_lea.sflag [#allocation4], %s288
        %s290 = sand.u32 %s142, 1
        %s291 = smul.addr %s290, 64
        %s292 = scalar_lea.vmem [#allocation10], %s291
        %s293 = smul.u32 8, %s24
        %s294 = smul.u32 8, %s24
        %v295 = vld [vmem:[%s250] sm:$0xff]
        %v296 = vld [vmem:[%s250 + $0x8] sm:$0xff]
        %v297 = vld [vmem:[%s250 + $0x10] sm:$0xff]
        %v298 = vld [vmem:[%s250 + $0x18] sm:$0xff]
        %v299 = vld [vmem:[%s250 + $0x20] sm:$0xff]
        %v300 = vld [vmem:[%s250 + $0x28] sm:$0xff]
        %v301 = vld [vmem:[%s250 + $0x30] sm:$0xff]
        %v302 = vld [vmem:[%s250 + $0x38] sm:$0xff]
        %v303 = vpack.c.bf16 %v296, %v295
        %v304 = vpack.c.bf16 %v298, %v297
        %v305 = vpack.c.bf16 %v300, %v299
        %v306 = vpack.c.bf16 %v302, %v301
        %v307 = vld [vmem:[#allocation5] sm:$0xff]
        %v308 = vld [vmem:[#allocation5 + $0x8] sm:$0xff]
        %v309 = vld [vmem:[#allocation5 + $0x10] sm:$0xff]
        %v310 = vld [vmem:[#allocation5 + $0x18] sm:$0xff]
        %v311 = vld [vmem:[#allocation5 + $0x20] sm:$0xff]
        %v312 = vld [vmem:[#allocation5 + $0x28] sm:$0xff]
        %v313 = vld [vmem:[#allocation5 + $0x30] sm:$0xff]
        %v314 = vld [vmem:[#allocation5 + $0x38] sm:$0xff]
        %v315 = vld [vmem:[#allocation5 + $0x40] sm:$0xff]
        %v316 = vld [vmem:[#allocation5 + $0x48] sm:$0xff]
        %v317 = vld [vmem:[#allocation5 + $0x50] sm:$0xff]
        %v318 = vld [vmem:[#allocation5 + $0x58] sm:$0xff]
        %v319 = vld [vmem:[#allocation5 + $0x60] sm:$0xff]
        %v320 = vld [vmem:[#allocation5 + $0x68] sm:$0xff]
        %v321 = vld [vmem:[#allocation5 + $0x70] sm:$0xff]
        %v322 = vld [vmem:[#allocation5 + $0x78] sm:$0xff]
        %v323 = vld [vmem:[#allocation7] sm:$0x3]
        %v325 = vperm.slane %v323, 0
        %v326 = vperm.slane %v323, 1
        %v345 = vunpack.c.l.b16 %v307
        %v346 = vunpack.c.h.b16 %v307
        %v347 = vunpack.c.l.b16 %v308
        %v348 = vunpack.c.h.b16 %v308
        %v349 = vunpack.c.l.b16 %v309
        %v350 = vunpack.c.h.b16 %v309
        %v351 = vunpack.c.l.b16 %v310
        %v352 = vunpack.c.h.b16 %v310
        %v353 = vunpack.c.l.b16 %v311
        %v354 = vunpack.c.h.b16 %v311
        %v355 = vunpack.c.l.b16 %v312
        %v356 = vunpack.c.h.b16 %v312
        %v357 = vunpack.c.l.b16 %v313
        %v358 = vunpack.c.h.b16 %v313
        %v359 = vunpack.c.l.b16 %v314
        %v360 = vunpack.c.h.b16 %v314
        %v361 = vunpack.c.l.b16 %v315
        %v362 = vunpack.c.h.b16 %v315
        %v363 = vunpack.c.l.b16 %v316
        %v364 = vunpack.c.h.b16 %v316
        %v365 = vunpack.c.l.b16 %v317
        %v366 = vunpack.c.h.b16 %v317
        %v367 = vunpack.c.l.b16 %v318
        %v368 = vunpack.c.h.b16 %v318
        %v369 = vunpack.c.l.b16 %v319
        %v370 = vunpack.c.h.b16 %v319
        %v371 = vunpack.c.l.b16 %v320
        %v372 = vunpack.c.h.b16 %v320
        %v373 = vunpack.c.l.b16 %v321
        %v374 = vunpack.c.h.b16 %v321
        %v375 = vunpack.c.l.b16 %v322
        %v376 = vunpack.c.h.b16 %v322
        %v377 = vpack.c.b16 %v347, %v345
        %v378 = vpack.c.b16 %v348, %v346
        %v379 = vpack.c.b16 %v351, %v349
        %v380 = vpack.c.b16 %v352, %v350
        %v381 = vpack.c.b16 %v355, %v353
        %v382 = vpack.c.b16 %v356, %v354
        %v383 = vpack.c.b16 %v359, %v357
        %v384 = vpack.c.b16 %v360, %v358
        %v385 = vpack.c.b16 %v363, %v361
        %v386 = vpack.c.b16 %v364, %v362
        %v387 = vpack.c.b16 %v367, %v365
        %v388 = vpack.c.b16 %v368, %v366
        %v389 = vpack.c.b16 %v371, %v369
        %v390 = vpack.c.b16 %v372, %v370
        %v391 = vpack.c.b16 %v375, %v373
        %v392 = vpack.c.b16 %v376, %v374
        %409 = vmatpush.bf16.msra.mxu0 %v391
        %410 = vmatpush.bf16.msra.mxu0 %v389
        %411 = vmatpush.bf16.msra.mxu0 %v387
        %412 = vmatpush.bf16.msra.mxu0 %v385
        %413 = vmatpush.bf16.msra.mxu0 %v383
        %414 = vmatpush.bf16.msra.mxu0 %v381
        %415 = vmatpush.bf16.msra.mxu0 %v379
        %416 = vmatpush.bf16.msra.mxu0 %v377
        %417 = vmatmul.bf16.gmra.mxu0 %v303
        %v418 = vpop.f32.mrf.mxu0
        %v419 = vadd.f32 %v325, %v418
        %v420 = vpop.f32.mrf.mxu0
        %v421 = vadd.f32 %v325, %v420
        %422 = vmatmul.bf16.gmra.mxu0 %v304
        %v423 = vpop.f32.mrf.mxu0
        %v424 = vadd.f32 %v325, %v423
        %v425 = vpop.f32.mrf.mxu0
        %v426 = vadd.f32 %v325, %v425
        %427 = vmatmul.bf16.gmra.mxu0 %v305
        %v428 = vpop.f32.mrf.mxu0
        %v429 = vadd.f32 %v325, %v428
        %v430 = vpop.f32.mrf.mxu0
        %v431 = vadd.f32 %v325, %v430
        %432 = vmatmul.bf16.gmra.mxu0 %v306
        %v433 = vpop.f32.mrf.mxu0
        %v434 = vadd.f32 %v325, %v433
        %v435 = vpop.f32.mrf.mxu0
        %v436 = vadd.f32 %v325, %v435
        %437 = vdwg.mxu0
        %438 = vmatpush.bf16.msra.mxu0 %v392
        %439 = vmatpush.bf16.msra.mxu0 %v390
        %440 = vmatpush.bf16.msra.mxu0 %v388
        %441 = vmatpush.bf16.msra.mxu0 %v386
        %442 = vmatpush.bf16.msra.mxu0 %v384
        %443 = vmatpush.bf16.msra.mxu0 %v382
        %444 = vmatpush.bf16.msra.mxu0 %v380
        %445 = vmatpush.bf16.msra.mxu0 %v378
        %446 = vmatmul.bf16.gmra.mxu0 %v303
        %v447 = vpop.f32.mrf.mxu0
        %v448 = vadd.f32 %v326, %v447
        %v449 = vpop.f32.mrf.mxu0
        %v450 = vadd.f32 %v326, %v449
        %451 = vmatmul.bf16.gmra.mxu0 %v304
        %v452 = vpop.f32.mrf.mxu0
        %v453 = vadd.f32 %v326, %v452
        %v454 = vpop.f32.mrf.mxu0
        %v455 = vadd.f32 %v326, %v454
        %456 = vmatmul.bf16.gmra.mxu0 %v305
        %v457 = vpop.f32.mrf.mxu0
        %v458 = vadd.f32 %v326, %v457
        %v459 = vpop.f32.mrf.mxu0
        %v460 = vadd.f32 %v326, %v459
        %461 = vmatmul.bf16.gmra.mxu0 %v306
        %v462 = vpop.f32.mrf.mxu0
        %v463 = vadd.f32 %v326, %v462
        %v464 = vpop.f32.mrf.mxu0
        %v465 = vadd.f32 %v326, %v464
        %466 = vdwg.mxu0
        %v467 = vmax.f32 %v419, 0.0
        %v468 = vmax.f32 %v448, 0.0
        %v469 = vmax.f32 %v421, 0.0
        %v470 = vmax.f32 %v450, 0.0
        %v471 = vmax.f32 %v424, 0.0
        %v472 = vmax.f32 %v453, 0.0
        %v473 = vmax.f32 %v426, 0.0
        %v474 = vmax.f32 %v455, 0.0
        %v475 = vmax.f32 %v429, 0.0
        %v476 = vmax.f32 %v458, 0.0
        %v477 = vmax.f32 %v431, 0.0
        %v478 = vmax.f32 %v460, 0.0
        %v479 = vmax.f32 %v434, 0.0
        %v480 = vmax.f32 %v463, 0.0
        %v481 = vmax.f32 %v436, 0.0
        %v482 = vmax.f32 %v465, 0.0
        %v483 = vpack.c.bf16 %v469, %v467
        %v484 = vpack.c.bf16 %v470, %v468
        %v485 = vpack.c.bf16 %v473, %v471
        %v486 = vpack.c.bf16 %v474, %v472
        %v487 = vpack.c.bf16 %v477, %v475
        %v488 = vpack.c.bf16 %v478, %v476
        %v489 = vpack.c.bf16 %v481, %v479
        %v490 = vpack.c.bf16 %v482, %v480
        %v491 = vld [vmem:[#allocation8] sm:$0xf]
        %v492 = vld [vmem:[#allocation8 + $0x4] sm:$0xf]
        %v493 = vld [vmem:[#allocation8 + $0x8] sm:$0xf]
        %v494 = vld [vmem:[#allocation8 + $0xc] sm:$0xf]
        %v495 = vld [vmem:[#allocation8 + $0x10] sm:$0xf]
        %v496 = vld [vmem:[#allocation8 + $0x14] sm:$0xf]
        %v497 = vld [vmem:[#allocation8 + $0x18] sm:$0xf]
        %v498 = vld [vmem:[#allocation8 + $0x1c] sm:$0xf]
        %v499 = vld [vmem:[#allocation8 + $0x20] sm:$0xf]
        %v500 = vld [vmem:[#allocation8 + $0x24] sm:$0xf]
        %v501 = vld [vmem:[#allocation8 + $0x28] sm:$0xf]
        %v502 = vld [vmem:[#allocation8 + $0x2c] sm:$0xf]
        %v503 = vld [vmem:[#allocation8 + $0x30] sm:$0xf]
        %v504 = vld [vmem:[#allocation8 + $0x34] sm:$0xf]
        %v505 = vld [vmem:[#allocation8 + $0x38] sm:$0xf]
        %v506 = vld [vmem:[#allocation8 + $0x3c] sm:$0xf]
        %v507 = vld [vmem:[#allocation8 + $0x40] sm:$0xf]
        %v508 = vld [vmem:[#allocation8 + $0x44] sm:$0xf]
        %v509 = vld [vmem:[#allocation8 + $0x48] sm:$0xf]
        %v510 = vld [vmem:[#allocation8 + $0x4c] sm:$0xf]
        %v511 = vld [vmem:[#allocation8 + $0x50] sm:$0xf]
        %v512 = vld [vmem:[#allocation8 + $0x54] sm:$0xf]
        %v513 = vld [vmem:[#allocation8 + $0x58] sm:$0xf]
        %v514 = vld [vmem:[#allocation8 + $0x5c] sm:$0xf]
        %v515 = vld [vmem:[#allocation8 + $0x60] sm:$0xf]
        %v516 = vld [vmem:[#allocation8 + $0x64] sm:$0xf]
        %v517 = vld [vmem:[#allocation8 + $0x68] sm:$0xf]
        %v518 = vld [vmem:[#allocation8 + $0x6c] sm:$0xf]
        %v519 = vld [vmem:[#allocation8 + $0x70] sm:$0xf]
        %v520 = vld [vmem:[#allocation8 + $0x74] sm:$0xf]
        %v521 = vld [vmem:[#allocation8 + $0x78] sm:$0xf]
        %v522 = vld [vmem:[#allocation8 + $0x7c] sm:$0xf]
        %v523 = vld [vmem:[%s4] sm:$0x1]
        %v525 = vperm.slane %v523, 0
        %v559 = vunpack.c.l.b16 %v491
        %v560 = vunpack.c.l.b16 %v492
        %v561 = vunpack.c.l.b16 %v493
        %v562 = vunpack.c.l.b16 %v494
        %v563 = vunpack.c.l.b16 %v495
        %v564 = vunpack.c.l.b16 %v496
        %v565 = vunpack.c.l.b16 %v497
        %v566 = vunpack.c.l.b16 %v498
        %v567 = vunpack.c.l.b16 %v499
        %v568 = vunpack.c.l.b16 %v500
        %v569 = vunpack.c.l.b16 %v501
        %v570 = vunpack.c.l.b16 %v502
        %v571 = vunpack.c.l.b16 %v503
        %v572 = vunpack.c.l.b16 %v504
        %v573 = vunpack.c.l.b16 %v505
        %v574 = vunpack.c.l.b16 %v506
        %v575 = vunpack.c.l.b16 %v507
        %v576 = vunpack.c.l.b16 %v508
        %v577 = vunpack.c.l.b16 %v509
        %v578 = vunpack.c.l.b16 %v510
        %v579 = vunpack.c.l.b16 %v511
        %v580 = vunpack.c.l.b16 %v512
        %v581 = vunpack.c.l.b16 %v513
        %v582 = vunpack.c.l.b16 %v514
        %v583 = vunpack.c.l.b16 %v515
        %v584 = vunpack.c.l.b16 %v516
        %v585 = vunpack.c.l.b16 %v517
        %v586 = vunpack.c.l.b16 %v518
        %v587 = vunpack.c.l.b16 %v519
        %v588 = vunpack.c.l.b16 %v520
        %v589 = vunpack.c.l.b16 %v521
        %v590 = vunpack.c.l.b16 %v522
        %v591 = vpack.c.b16 %v560, %v559
        %v592 = vpack.c.b16 %v562, %v561
        %v593 = vpack.c.b16 %v564, %v563
        %v594 = vpack.c.b16 %v566, %v565
        %v595 = vpack.c.b16 %v568, %v567
        %v596 = vpack.c.b16 %v570, %v569
        %v597 = vpack.c.b16 %v572, %v571
        %v598 = vpack.c.b16 %v574, %v573
        %v599 = vpack.c.b16 %v576, %v575
        %v600 = vpack.c.b16 %v578, %v577
        %v601 = vpack.c.b16 %v580, %v579
        %v602 = vpack.c.b16 %v582, %v581
        %v603 = vpack.c.b16 %v584, %v583
        %v604 = vpack.c.b16 %v586, %v585
        %v605 = vpack.c.b16 %v588, %v587
        %v606 = vpack.c.b16 %v590, %v589
        %623 = vmatpush.bf16.msra.mxu0 %v598
        %624 = vmatpush.bf16.msra.mxu0 %v597
        %625 = vmatpush.bf16.msra.mxu0 %v596
        %626 = vmatpush.bf16.msra.mxu0 %v595
        %627 = vmatpush.bf16.msra.mxu0 %v594
        %628 = vmatpush.bf16.msra.mxu0 %v593
        %629 = vmatpush.bf16.msra.mxu0 %v592
        %630 = vmatpush.bf16.msra.mxu0 %v591
        %631 = vmatmul.bf16.gmra.mxu0 %v483
        %v632 = vpop.f32.mrf.mxu0
        %v633 = vadd.f32 %v525, %v632
        %v634 = vpop.f32.mrf.mxu0
        %v635 = vadd.f32 %v525, %v634
        %636 = vmatmul.bf16.gmra.mxu0 %v485
        %v637 = vpop.f32.mrf.mxu0
        %v638 = vadd.f32 %v525, %v637
        %v639 = vpop.f32.mrf.mxu0
        %v640 = vadd.f32 %v525, %v639
        %641 = vmatmul.bf16.gmra.mxu0 %v487
        %v642 = vpop.f32.mrf.mxu0
        %v643 = vadd.f32 %v525, %v642
        %v644 = vpop.f32.mrf.mxu0
        %v645 = vadd.f32 %v525, %v644
        %646 = vmatmul.bf16.gmra.mxu0 %v489
        %v647 = vpop.f32.mrf.mxu0
        %v648 = vadd.f32 %v525, %v647
        %v649 = vpop.f32.mrf.mxu0
        %v650 = vadd.f32 %v525, %v649
        %651 = vdwg.mxu0
        %652 = vmatpush.bf16.msra.mxu0 %v606
        %653 = vmatpush.bf16.msra.mxu0 %v605
        %654 = vmatpush.bf16.msra.mxu0 %v604
        %655 = vmatpush.bf16.msra.mxu0 %v603
        %656 = vmatpush.bf16.msra.mxu0 %v602
        %657 = vmatpush.bf16.msra.mxu0 %v601
        %658 = vmatpush.bf16.msra.mxu0 %v600
        %659 = vmatpush.bf16.msra.mxu0 %v599
        %660 = vmatmul.bf16.gmra.mxu0 %v484
        %v661 = vpop.f32.mrf.mxu0
        %v662 = vadd.f32 %v633, %v661
        %v663 = vpop.f32.mrf.mxu0
        %v664 = vadd.f32 %v635, %v663
        %665 = vmatmul.bf16.gmra.mxu0 %v486
        %v666 = vpop.f32.mrf.mxu0
        %v667 = vadd.f32 %v638, %v666
        %v668 = vpop.f32.mrf.mxu0
        %v669 = vadd.f32 %v640, %v668
        %670 = vmatmul.bf16.gmra.mxu0 %v488
        %v671 = vpop.f32.mrf.mxu0
        %v672 = vadd.f32 %v643, %v671
        %v673 = vpop.f32.mrf.mxu0
        %v674 = vadd.f32 %v645, %v673
        %675 = vmatmul.bf16.gmra.mxu0 %v490
        %v676 = vpop.f32.mrf.mxu0
        %v677 = vadd.f32 %v648, %v676
        %v678 = vpop.f32.mrf.mxu0
        %v679 = vadd.f32 %v650, %v678
        %680 = vdwg.mxu0
        %v681 = vadd.f32 %v295, %v662
        %v682 = vadd.f32 %v296, %v664
        %v683 = vadd.f32 %v297, %v667
        %v684 = vadd.f32 %v298, %v669
        %v685 = vadd.f32 %v299, %v672
        %v686 = vadd.f32 %v300, %v674
        %v687 = vadd.f32 %v301, %v677
        %v688 = vadd.f32 %v302, %v679
        %689 = vst [vmem:[%s292] sm:$0xff] %v681
        %690 = vst [vmem:[%s292 + $0x8] sm:$0xff] %v682
        %691 = vst [vmem:[%s292 + $0x10] sm:$0xff] %v683
        %692 = vst [vmem:[%s292 + $0x18] sm:$0xff] %v684
        %693 = vst [vmem:[%s292 + $0x20] sm:$0xff] %v685
        %694 = vst [vmem:[%s292 + $0x28] sm:$0xff] %v686
        %695 = vst [vmem:[%s292 + $0x30] sm:$0xff] %v687
        %696 = vst [vmem:[%s292 + $0x38] sm:$0xff] %v688
        %s697 = sand.u32 %s142, 1
        %s698 = scalar_lea.sflag [#allocation4], %s697
        %s699 = sand.u32 %s142, 1
        %s700 = smul.addr %s699, 64
        %s701 = scalar_lea.vmem [#allocation10], %s700
        // Predicated region
        $region57: #{tpu_custom_call.1} parent=39 // pred_check
          %p702 = pneg %p152
        $region58: #{tpu_custom_call.1} parent=39 // pred_check_branch
          %704 = sbr.rel (%p702) target = $region60
        $region59: #{tpu_custom_call.1} parent=39 // pred_region
          %s705 = smul.u32 8, %s24
          %707 = vsyncadd %s698, 0
          %s708 = smul.addr %s705, 8
          %s709 = scalar_lea.hbm %s5, %s708
          %s710 = sshll.u32 %s701, 4
          %s711 = int_to_ptr.vmem [resolvable:$true] %s710
          %s712 = sshll.u32 %s709, 4
          %s713 = int_to_ptr.hbm [resolvable:$true] %s712
          %718 = dma.vmem_to_hbm [thread:$0]  %s711, 1024, %s713, %s698, 128, 128, 8
        $region60: #{tpu_custom_call.1} parent=39 // pred_fallthru
          _
      $region40: #{tpu_custom_call.1} parent=5 // pred_fallthru
        _
      %p719 = scmp.le.s32.totalorder 2, %s19
      // Predicated region
      $region61: #{tpu_custom_call.1} parent=5 // pred_check
        %p720 = pneg %p719
      $region62: #{tpu_custom_call.1} parent=5 // pred_check_branch
        %722 = sbr.rel (%p720) target = $region64
      $region63: #{tpu_custom_call.1} parent=5 // pred_region
        %s723 = ssub.s32 %s19, 2
        // Predicated region
        $region65: #{tpu_custom_call.1} parent=63 // pred_check
          %p724 = pneg %p158
        $region66: #{tpu_custom_call.1} parent=63 // pred_check_branch
          %726 = sbr.rel (%p724) target = $region68
        $region67: #{tpu_custom_call.1} parent=63 // pred_region
          %s727 = sand.u32 %s143, 1
          %s728 = scalar_lea.sflag [#allocation4], %s727
          %s729 = sand.u32 %s143, 1
          %s730 = smul.addr %s729, 64
          %s731 = scalar_lea.vmem [#allocation10], %s730
          %733 = dma.done %s728, 1024
        $region68: #{tpu_custom_call.1} parent=63 // pred_fallthru
          _
      $region64: #{tpu_custom_call.1} parent=5 // pred_fallthru
        _
    $region6: #{tpu_custom_call.1} parent=1 // loop_footer
      %s23 = sadd.s32 1, %s19
    $region7: #{tpu_custom_call.1} parent=1 // loop_footer_branch
      %18 = sbr.rel target = $region3
    $region8: #{tpu_custom_call.1} parent=1 // loop_exit
      _
    %734 = vsyncpa [#allocation3], 1
    %s735 = scalar_lea.sflag [#allocation3], 1
    %736 = vsyncpa %s735, 1
    %737 = vsyncpa [#allocation6], 1
    %738 = vsyncpa [#allocation9], 1
    %739 = vsyncpa [#allocation4], 1
    %s740 = scalar_lea.sflag [#allocation4], 1
    %741 = vsyncpa %s740, 1

</llo_original>
